<compile_context>
chip_gen: v7x
topology: tpu7x:2x2x1
jax: 0.10.0
libtpu: 0.0.40
codegen_flags: <defaults>
</compile_context>

<pallas_src>
import functools

import jax
import jax.numpy as jnp
import numpy as np
from jax import lax
from jax.experimental import pallas as pl
from jax.experimental.pallas import tpu as pltpu

C_IN, C_OUT, K = 4, 4, 5
EPS = 1e-5  # nn.InstanceNorm2d default


def resnet_block_kernel(x_ref, w_ref, o_ref, xp_ref, patches_ref,
                        *, c_in, k, h, w):
    # x_ref      : (1, c_in, h*w)        VMEM  raw image, each plane lane-dense
    # w_ref      : (c_out, kpad)         VMEM  weights, cols ordered (kh, kw, ci), zero-padded
    # o_ref      : (1, c_out, h*w)       VMEM  lane-dense, already-cropped output
    # xp_ref     : (c_in, hp*wp + k-1)   VMEM  scratch: flattened reflect-padded plane
    # patches_ref: (kpad, h*wp)          VMEM  scratch: im2col matrix
    pad = (k - 1) // 2
    hp, wp = h + 2 * pad, w + 2 * pad
    flat = h * wp                      # lane width of the conv working layout
    kk = k * k * c_in
    kpad = patches_ref.shape[0]

    x = x_ref[0]                                           # (c_in, h*w)

    # ---- ReflectionPad2d(pad), built fully inside the kernel ---------------
    # interior rows / interior cols: straight 16-lane row copies.
    for r in range(h):
        base = (r + pad) * wp + pad
        xp_ref[:, base:base + w] = x[:, r * w:(r + 1) * w]
    # left/right reflect columns of every row at once via uniform lane shifts.
    v = xp_ref[:, :hp * wp]
    col = lax.broadcasted_iota(jnp.int32, (c_in, hp * wp), 1) % wp
    for j in range(pad):
        v = jnp.where(col == j, jnp.roll(v, -2 * (pad - j), axis=1), v)
        v = jnp.where(col == wp - 1 - j, jnp.roll(v, 2 * (pad - j), axis=1), v)
    xp_ref[:, :hp * wp] = v
    # top/bottom reflect rows: copy complete (already column-padded) interior rows.
    for j in range(pad):
        xp_ref[:, j * wp:(j + 1) * wp] = \
            v[:, (2 * pad - j) * wp:(2 * pad - j + 1) * wp]
        xp_ref[:, (hp - 1 - j) * wp:(hp - j) * wp] = \
            v[:, (h - 1 + j) * wp:(h + j) * wp]
    # k-1 tail zeros so every tap slice below stays in-bounds; for pad=2,k=5
    # those positions only ever feed masked/cropped columns.
    xp_ref[:, hp * wp:] = jnp.zeros((c_in, xp_ref.shape[1] - hp * wp), jnp.float32)

    # ---- im2col: tap (kh,kw) is one contiguous lane slice of xp ------------
    # Taps written in pairs so stores are 8-sublane aligned (2 * c_in = 8 rows).
    for t in range(0, k * k - 1, 2):
        kh0, kw0 = divmod(t, k)
        kh1, kw1 = divmod(t + 1, k)
        s0 = xp_ref[:, kh0 * wp + kw0:kh0 * wp + kw0 + flat]
        s1 = xp_ref[:, kh1 * wp + kw1:kh1 * wp + kw1 + flat]
        patches_ref[t * c_in:(t + 2) * c_in, :] = jnp.concatenate([s0, s1], axis=0)
    t_last = k * k - 1
    kh, kw = divmod(t_last, k)
    patches_ref[t_last * c_in:(t_last + 1) * c_in, :] = \
        xp_ref[:, kh * wp + kw:kh * wp + kw + flat]
    # Zero the K-padding rows (weight columns there are zero, but uninitialized
    # scratch could hold NaNs and 0 * NaN would poison the matmul).
    patches_ref[kk:, :] = jnp.zeros((kpad - kk, flat), jnp.float32)

    # ---- Conv2d as one MXU matmul with f32 accumulation --------------------
    # Conv bias is dropped: it cancels exactly in InstanceNorm2d(affine=False).
    acc = jnp.dot(w_ref[...], patches_ref[...], preferred_element_type=jnp.float32)

    # ---- InstanceNorm2d (affine=False): single-pass masked statistics ------
    m = (lax.broadcasted_iota(jnp.int32, (1, flat), 1) % wp < w).astype(jnp.float32)
    inv_cnt = 1.0 / float(h * w)
    am = acc * m
    mean = jnp.sum(am, axis=-1, keepdims=True) * inv_cnt            # (c_out, 1)
    var = jnp.sum(am * acc, axis=-1, keepdims=True) * inv_cnt - mean * mean
    y = (acc - mean) * lax.rsqrt(var + EPS)

    # ---- compact lane-dense store: drop the wp-w padded columns in-kernel --
    for r in range(h):
        o_ref[0, :, r * w:(r + 1) * w] = y[:, r * wp:r * wp + w]


@jax.jit
def resnet_block_forward(x, weight, bias):
    """Forward of the (reflect, InstanceNorm2d, no-dropout) ResnetBlock.

    x: (N, C_in, H, W) f32, weight: (C_out, C_in, 5, 5), bias: (C_out,).
    `bias` is accepted for interface parity but is mathematically cancelled by
    InstanceNorm2d(affine=False), so it never reaches the kernel.
    """
    del bias
    n, c_in, h, w = x.shape
    c_out, _, k, _ = weight.shape
    pad = (k - 1) // 2                 # ReflectionPad2d(2) for k=5
    hp, wp = h + 2 * pad, w + 2 * pad
    kk = k * k * c_in
    kpad = ((kk + 127) // 128) * 128

    # Free contiguous reshape: each image plane becomes one lane-dense row.
    x_flat = x.reshape(n, c_in, h * w).astype(jnp.float32)

    # Weight matrix with columns ordered (kh, kw, ci) to match the tap-major
    # patches, zero-padded along K to 128 (tiny; fuses into one op under jit).
    w2d = jnp.transpose(weight, (0, 2, 3, 1)).reshape(c_out, kk).astype(jnp.float32)
    w2d = jnp.pad(w2d, ((0, 0), (0, kpad - kk)))

    kernel = functools.partial(resnet_block_kernel, c_in=c_in, k=k, h=h, w=w)

    out_flat = pl.pallas_call(
        kernel,
        out_shape=jax.ShapeDtypeStruct((n, c_out, h * w), jnp.float32),
        grid_spec=pltpu.PrefetchScalarGridSpec(
            num_scalar_prefetch=0,
            grid=(n,),
            in_specs=[
                pl.BlockSpec((1, c_in, h * w), lambda i: (i, 0, 0)),
                pl.BlockSpec((c_out, kpad), lambda i: (0, 0)),
            ],
            out_specs=pl.BlockSpec((1, c_out, h * w), lambda i: (i, 0, 0)),
            scratch_shapes=[
                pltpu.VMEM((c_in, hp * wp + (k - 1)), jnp.float32),
                pltpu.VMEM((kpad, h * wp), jnp.float32),
            ],
        ),
        compiler_params=pltpu.CompilerParams(dimension_semantics=("parallel",)),
    )(x_flat, w2d)

    # Free contiguous reshape back to NCHW (the crop already happened in-kernel).
    return out_flat.reshape(n, c_out, h, w)


def reference(x, weight, bias):
    """Pure-JAX reference: ReflectionPad2d(2) -> Conv2d(5, bias) -> InstanceNorm2d."""
    pad = 2
    xp = jnp.pad(x, ((0, 0), (0, 0), (pad, pad), (pad, pad)), mode="reflect")
    y = jax.lax.conv_general_dilated(
        xp, weight, window_strides=(1, 1), padding="VALID",
        dimension_numbers=("NCHW", "OIHW", "NCHW"),
    )
    y = y + bias[None, :, None, None]
    mean = jnp.mean(y, axis=(2, 3), keepdims=True)
    var = jnp.mean((y - mean) ** 2, axis=(2, 3), keepdims=True)
    return (y - mean) * jax.lax.rsqrt(var + EPS)


if __name__ == "__main__":
    key = jax.random.PRNGKey(0)
    kx, kw, kb = jax.random.split(key, 3)

    # Small shapes consistent with the module: N=2, C_in=C_out=4, H=W=16
    x = jax.random.normal(kx, (2, C_IN, 16, 16), dtype=jnp.float32)

    # Deterministic Conv2d-style init (uniform in +-1/sqrt(fan_in))
    fan_in = C_IN * K * K
    bound = 1.0 / float(np.sqrt(fan_in))
    weight = jax.random.uniform(
        kw, (C_OUT, C_IN, K, K), minval=-bound, maxval=bound, dtype=jnp.float32
    )
    bias = jax.random.uniform(
        kb, (C_OUT,), minval=-bound, maxval=bound, dtype=jnp.float32
    )
    # TODO(synk): Dropout(0.5) branch (use_dropout=True) omitted; stochastic training-mode
    # op with no deterministic forward semantics for this synthetic check.

    out = jax.block_until_ready(resnet_block_forward(x, weight, bias))
    ref = jax.block_until_ready(reference(x, weight, bias))

    assert out.shape == (2, C_OUT, 16, 16)
    np.testing.assert_allclose(np.asarray(out), np.asarray(ref), atol=1e-4, rtol=1e-4)
    print("KERNEL_OK")
</pallas_src>

<mosaic_0001>
module attributes {stable_mosaic.version = 11 : i64} {
  func.func @resnet_block_kernel(%arg0: i32, %arg1: memref<1x4x256xf32, #tpu.memory_space<vmem>>, %arg2: memref<4x128xf32, #tpu.memory_space<vmem>>, %arg3: memref<1x4x256xf32, #tpu.memory_space<vmem>>, %arg4: memref<4x404xf32, #tpu.memory_space<vmem>>, %arg5: memref<128x320xf32, #tpu.memory_space<vmem>>) attributes {dimension_semantics = [#tpu.dimension_semantics<parallel>], iteration_bounds = array<i64: 2>, scalar_prefetch = 0 : i64, scratch_operands = 2 : i64, tpu.core_type = #tpu.core_type<tc>, window_params = [{transform_indices = @transform_0, window_bounds = array<i64: 1, 4, 256>}, {pipeline_mode = #tpu.pipeline_mode<synchronous>, transform_indices = @transform_1, window_bounds = array<i64: 4, 128>}, {transform_indices = @transform_2, window_bounds = array<i64: 1, 4, 256>}]} {
    %c0 = arith.constant 0 : index
    %c0_0 = arith.constant 0 : index
    %c0_1 = arith.constant 0 : index
    %0 = vector.load %arg1[%c0, %c0_0, %c0_1] : memref<1x4x256xf32, #tpu.memory_space<vmem>>, vector<1x4x256xf32>
    %1 = vector.shape_cast %0 : vector<1x4x256xf32> to vector<4x256xf32>
    %2 = vector.extract_strided_slice %1 {offsets = [0, 0], sizes = [4, 16], strides = [1, 1]} : vector<4x256xf32> to vector<4x16xf32>
    %c0_2 = arith.constant 0 : index
    %c42 = arith.constant 42 : index
    %3 = vector.load %arg4[%c0_2, %c42] : memref<4x404xf32, #tpu.memory_space<vmem>>, vector<4x16xf32>
    tpu.vector_store %arg4[%c0_2, %c42], %2 {strides = array<i32>} : memref<4x404xf32, #tpu.memory_space<vmem>>, vector<4x16xf32>,
    %4 = vector.extract_strided_slice %1 {offsets = [0, 16], sizes = [4, 16], strides = [1, 1]} : vector<4x256xf32> to vector<4x16xf32>
    %c0_3 = arith.constant 0 : index
    %c62 = arith.constant 62 : index
    %5 = vector.load %arg4[%c0_3, %c62] : memref<4x404xf32, #tpu.memory_space<vmem>>, vector<4x16xf32>
    tpu.vector_store %arg4[%c0_3, %c62], %4 {strides = array<i32>} : memref<4x404xf32, #tpu.memory_space<vmem>>, vector<4x16xf32>,
    %6 = vector.extract_strided_slice %1 {offsets = [0, 32], sizes = [4, 16], strides = [1, 1]} : vector<4x256xf32> to vector<4x16xf32>
    %c0_4 = arith.constant 0 : index
    %c82 = arith.constant 82 : index
    %7 = vector.load %arg4[%c0_4, %c82] : memref<4x404xf32, #tpu.memory_space<vmem>>, vector<4x16xf32>
    tpu.vector_store %arg4[%c0_4, %c82], %6 {strides = array<i32>} : memref<4x404xf32, #tpu.memory_space<vmem>>, vector<4x16xf32>,
    %8 = vector.extract_strided_slice %1 {offsets = [0, 48], sizes = [4, 16], strides = [1, 1]} : vector<4x256xf32> to vector<4x16xf32>
    %c0_5 = arith.constant 0 : index
    %c102 = arith.constant 102 : index
    %9 = vector.load %arg4[%c0_5, %c102] : memref<4x404xf32, #tpu.memory_space<vmem>>, vector<4x16xf32>
    tpu.vector_store %arg4[%c0_5, %c102], %8 {strides = array<i32>} : memref<4x404xf32, #tpu.memory_space<vmem>>, vector<4x16xf32>,
    %10 = vector.extract_strided_slice %1 {offsets = [0, 64], sizes = [4, 16], strides = [1, 1]} : vector<4x256xf32> to vector<4x16xf32>
    %c0_6 = arith.constant 0 : index
    %c122 = arith.constant 122 : index
    %11 = vector.load %arg4[%c0_6, %c122] : memref<4x404xf32, #tpu.memory_space<vmem>>, vector<4x16xf32>
    tpu.vector_store %arg4[%c0_6, %c122], %10 {strides = array<i32>} : memref<4x404xf32, #tpu.memory_space<vmem>>, vector<4x16xf32>,
    %12 = vector.extract_strided_slice %1 {offsets = [0, 80], sizes = [4, 16], strides = [1, 1]} : vector<4x256xf32> to vector<4x16xf32>
    %c0_7 = arith.constant 0 : index
    %c142 = arith.constant 142 : index
    %13 = vector.load %arg4[%c0_7, %c142] : memref<4x404xf32, #tpu.memory_space<vmem>>, vector<4x16xf32>
    tpu.vector_store %arg4[%c0_7, %c142], %12 {strides = array<i32>} : memref<4x404xf32, #tpu.memory_space<vmem>>, vector<4x16xf32>,
    %14 = vector.extract_strided_slice %1 {offsets = [0, 96], sizes = [4, 16], strides = [1, 1]} : vector<4x256xf32> to vector<4x16xf32>
    %c0_8 = arith.constant 0 : index
    %c162 = arith.constant 162 : index
    %15 = vector.load %arg4[%c0_8, %c162] : memref<4x404xf32, #tpu.memory_space<vmem>>, vector<4x16xf32>
    tpu.vector_store %arg4[%c0_8, %c162], %14 {strides = array<i32>} : memref<4x404xf32, #tpu.memory_space<vmem>>, vector<4x16xf32>,
    %16 = vector.extract_strided_slice %1 {offsets = [0, 112], sizes = [4, 16], strides = [1, 1]} : vector<4x256xf32> to vector<4x16xf32>
    %c0_9 = arith.constant 0 : index
    %c182 = arith.constant 182 : index
    %17 = vector.load %arg4[%c0_9, %c182] : memref<4x404xf32, #tpu.memory_space<vmem>>, vector<4x16xf32>
    tpu.vector_store %arg4[%c0_9, %c182], %16 {strides = array<i32>} : memref<4x404xf32, #tpu.memory_space<vmem>>, vector<4x16xf32>,
    %18 = vector.extract_strided_slice %1 {offsets = [0, 128], sizes = [4, 16], strides = [1, 1]} : vector<4x256xf32> to vector<4x16xf32>
    %c0_10 = arith.constant 0 : index
    %c202 = arith.constant 202 : index
    %19 = vector.load %arg4[%c0_10, %c202] : memref<4x404xf32, #tpu.memory_space<vmem>>, vector<4x16xf32>
    tpu.vector_store %arg4[%c0_10, %c202], %18 {strides = array<i32>} : memref<4x404xf32, #tpu.memory_space<vmem>>, vector<4x16xf32>,
    %20 = vector.extract_strided_slice %1 {offsets = [0, 144], sizes = [4, 16], strides = [1, 1]} : vector<4x256xf32> to vector<4x16xf32>
    %c0_11 = arith.constant 0 : index
    %c222 = arith.constant 222 : index
    %21 = vector.load %arg4[%c0_11, %c222] : memref<4x404xf32, #tpu.memory_space<vmem>>, vector<4x16xf32>
    tpu.vector_store %arg4[%c0_11, %c222], %20 {strides = array<i32>} : memref<4x404xf32, #tpu.memory_space<vmem>>, vector<4x16xf32>,
    %22 = vector.extract_strided_slice %1 {offsets = [0, 160], sizes = [4, 16], strides = [1, 1]} : vector<4x256xf32> to vector<4x16xf32>
    %c0_12 = arith.constant 0 : index
    %c242 = arith.constant 242 : index
    %23 = vector.load %arg4[%c0_12, %c242] : memref<4x404xf32, #tpu.memory_space<vmem>>, vector<4x16xf32>
    tpu.vector_store %arg4[%c0_12, %c242], %22 {strides = array<i32>} : memref<4x404xf32, #tpu.memory_space<vmem>>, vector<4x16xf32>,
    %24 = vector.extract_strided_slice %1 {offsets = [0, 176], sizes = [4, 16], strides = [1, 1]} : vector<4x256xf32> to vector<4x16xf32>
    %c0_13 = arith.constant 0 : index
    %c262 = arith.constant 262 : index
    %25 = vector.load %arg4[%c0_13, %c262] : memref<4x404xf32, #tpu.memory_space<vmem>>, vector<4x16xf32>
    tpu.vector_store %arg4[%c0_13, %c262], %24 {strides = array<i32>} : memref<4x404xf32, #tpu.memory_space<vmem>>, vector<4x16xf32>,
    %26 = vector.extract_strided_slice %1 {offsets = [0, 192], sizes = [4, 16], strides = [1, 1]} : vector<4x256xf32> to vector<4x16xf32>
    %c0_14 = arith.constant 0 : index
    %c282 = arith.constant 282 : index
    %27 = vector.load %arg4[%c0_14, %c282] : memref<4x404xf32, #tpu.memory_space<vmem>>, vector<4x16xf32>
    tpu.vector_store %arg4[%c0_14, %c282], %26 {strides = array<i32>} : memref<4x404xf32, #tpu.memory_space<vmem>>, vector<4x16xf32>,
    %28 = vector.extract_strided_slice %1 {offsets = [0, 208], sizes = [4, 16], strides = [1, 1]} : vector<4x256xf32> to vector<4x16xf32>
    %c0_15 = arith.constant 0 : index
    %c302 = arith.constant 302 : index
    %29 = vector.load %arg4[%c0_15, %c302] : memref<4x404xf32, #tpu.memory_space<vmem>>, vector<4x16xf32>
    tpu.vector_store %arg4[%c0_15, %c302], %28 {strides = array<i32>} : memref<4x404xf32, #tpu.memory_space<vmem>>, vector<4x16xf32>,
    %30 = vector.extract_strided_slice %1 {offsets = [0, 224], sizes = [4, 16], strides = [1, 1]} : vector<4x256xf32> to vector<4x16xf32>
    %c0_16 = arith.constant 0 : index
    %c322 = arith.constant 322 : index
    %31 = vector.load %arg4[%c0_16, %c322] : memref<4x404xf32, #tpu.memory_space<vmem>>, vector<4x16xf32>
    tpu.vector_store %arg4[%c0_16, %c322], %30 {strides = array<i32>} : memref<4x404xf32, #tpu.memory_space<vmem>>, vector<4x16xf32>,
    %32 = vector.extract_strided_slice %1 {offsets = [0, 240], sizes = [4, 16], strides = [1, 1]} : vector<4x256xf32> to vector<4x16xf32>
    %c0_17 = arith.constant 0 : index
    %c342 = arith.constant 342 : index
    %33 = vector.load %arg4[%c0_17, %c342] : memref<4x404xf32, #tpu.memory_space<vmem>>, vector<4x16xf32>
    tpu.vector_store %arg4[%c0_17, %c342], %32 {strides = array<i32>} : memref<4x404xf32, #tpu.memory_space<vmem>>, vector<4x16xf32>,
    %c0_18 = arith.constant 0 : index
    %c0_19 = arith.constant 0 : index
    %34 = vector.load %arg4[%c0_18, %c0_19] : memref<4x404xf32, #tpu.memory_space<vmem>>, vector<4x400xf32>
    %35 = tpu.iota {dimensions = array<i32: 1>} : vector<4x400xi32>
    %c20_i32 = arith.constant 20 : i32
    %c0_i32 = arith.constant 0 : i32
    %36 = arith.cmpi eq, %c20_i32, %c0_i32 : i32
    %c1_i32 = arith.constant 1 : i32
    %37 = arith.select %36, %c1_i32, %c20_i32 : i32
    %38 = vector.broadcast %37 : i32 to vector<4x400xi32>
    %39 = arith.remsi %35, %38 : vector<4x400xi32>
    %c0_i32_20 = arith.constant 0 : i32
    %40 = vector.broadcast %c0_i32_20 : i32 to vector<4x400xi32>
    %41 = arith.cmpi ne, %39, %40 : vector<4x400xi32>
    %c0_i32_21 = arith.constant 0 : i32
    %42 = vector.broadcast %c0_i32_21 : i32 to vector<4x400xi32>
    %43 = arith.cmpi slt, %39, %42 : vector<4x400xi32>
    %c0_i32_22 = arith.constant 0 : i32
    %44 = arith.cmpi slt, %37, %c0_i32_22 : i32
    %45 = vector.broadcast %44 : i1 to vector<4x400xi1>
    %46 = vector.broadcast %45 : vector<4x400xi1> to vector<4x400xi1>
    %47 = arith.xori %43, %46 : vector<4x400xi1>
    %48 = arith.andi %47, %41 : vector<4x400xi1>
    %49 = vector.broadcast %37 : i32 to vector<4x400xi32>
    %50 = arith.addi %39, %49 : vector<4x400xi32>
    %51 = arith.select %48, %50, %39 : vector<4x400xi1>, vector<4x400xi32>
    %c0_i32_23 = arith.constant 0 : i32
    %52 = vector.broadcast %c0_i32_23 : i32 to vector<4x400xi32>
    %53 = arith.cmpi eq, %51, %52 : vector<4x400xi32>
    %54 = vector.extract_strided_slice %34 {offsets = [0, 4], sizes = [4, 396], strides = [1, 1]} : vector<4x400xf32> to vector<4x396xf32>
    %55 = vector.extract_strided_slice %34 {offsets = [0, 0], sizes = [4, 4], strides = [1, 1]} : vector<4x400xf32> to vector<4x4xf32>
    %56 = tpu.concatenate %54, %55 in 1 : vector<4x396xf32>, vector<4x4xf32> -> vector<4x400xf32>
    %57 = arith.select %53, %56, %34 : vector<4x400xi1>, vector<4x400xf32>
    %c19_i32 = arith.constant 19 : i32
    %58 = vector.broadcast %c19_i32 : i32 to vector<4x400xi32>
    %59 = arith.cmpi eq, %51, %58 : vector<4x400xi32>
    %60 = vector.extract_strided_slice %57 {offsets = [0, 396], sizes = [4, 4], strides = [1, 1]} : vector<4x400xf32> to vector<4x4xf32>
    %61 = vector.extract_strided_slice %57 {offsets = [0, 0], sizes = [4, 396], strides = [1, 1]} : vector<4x400xf32> to vector<4x396xf32>
    %62 = tpu.concatenate %60, %61 in 1 : vector<4x4xf32>, vector<4x396xf32> -> vector<4x400xf32>
    %63 = arith.select %59, %62, %57 : vector<4x400xi1>, vector<4x400xf32>
    %c1_i32_24 = arith.constant 1 : i32
    %64 = vector.broadcast %c1_i32_24 : i32 to vector<4x400xi32>
    %65 = arith.cmpi eq, %51, %64 : vector<4x400xi32>
    %66 = vector.extract_strided_slice %63 {offsets = [0, 2], sizes = [4, 398], strides = [1, 1]} : vector<4x400xf32> to vector<4x398xf32>
    %67 = vector.extract_strided_slice %63 {offsets = [0, 0], sizes = [4, 2], strides = [1, 1]} : vector<4x400xf32> to vector<4x2xf32>
    %68 = tpu.concatenate %66, %67 in 1 : vector<4x398xf32>, vector<4x2xf32> -> vector<4x400xf32>
    %69 = arith.select %65, %68, %63 : vector<4x400xi1>, vector<4x400xf32>
    %c18_i32 = arith.constant 18 : i32
    %70 = vector.broadcast %c18_i32 : i32 to vector<4x400xi32>
    %71 = arith.cmpi eq, %51, %70 : vector<4x400xi32>
    %72 = vector.extract_strided_slice %69 {offsets = [0, 398], sizes = [4, 2], strides = [1, 1]} : vector<4x400xf32> to vector<4x2xf32>
    %73 = vector.extract_strided_slice %69 {offsets = [0, 0], sizes = [4, 398], strides = [1, 1]} : vector<4x400xf32> to vector<4x398xf32>
    %74 = tpu.concatenate %72, %73 in 1 : vector<4x2xf32>, vector<4x398xf32> -> vector<4x400xf32>
    %75 = arith.select %71, %74, %69 : vector<4x400xi1>, vector<4x400xf32>
    %c0_25 = arith.constant 0 : index
    %c0_26 = arith.constant 0 : index
    %76 = vector.load %arg4[%c0_25, %c0_26] : memref<4x404xf32, #tpu.memory_space<vmem>>, vector<4x400xf32>
    tpu.vector_store %arg4[%c0_25, %c0_26], %75 {strides = array<i32>} : memref<4x404xf32, #tpu.memory_space<vmem>>, vector<4x400xf32>,
    %77 = vector.extract_strided_slice %75 {offsets = [0, 80], sizes = [4, 20], strides = [1, 1]} : vector<4x400xf32> to vector<4x20xf32>
    %c0_27 = arith.constant 0 : index
    %c0_28 = arith.constant 0 : index
    %78 = vector.load %arg4[%c0_27, %c0_28] : memref<4x404xf32, #tpu.memory_space<vmem>>, vector<4x20xf32>
    tpu.vector_store %arg4[%c0_27, %c0_28], %77 {strides = array<i32>} : memref<4x404xf32, #tpu.memory_space<vmem>>, vector<4x20xf32>,
    %79 = vector.extract_strided_slice %75 {offsets = [0, 300], sizes = [4, 20], strides = [1, 1]} : vector<4x400xf32> to vector<4x20xf32>
    %c0_29 = arith.constant 0 : index
    %c380 = arith.constant 380 : index
    %80 = vector.load %arg4[%c0_29, %c380] : memref<4x404xf32, #tpu.memory_space<vmem>>, vector<4x20xf32>
    tpu.vector_store %arg4[%c0_29, %c380], %79 {strides = array<i32>} : memref<4x404xf32, #tpu.memory_space<vmem>>, vector<4x20xf32>,
    %81 = vector.extract_strided_slice %75 {offsets = [0, 60], sizes = [4, 20], strides = [1, 1]} : vector<4x400xf32> to vector<4x20xf32>
    %c0_30 = arith.constant 0 : index
    %c20 = arith.constant 20 : index
    %82 = vector.load %arg4[%c0_30, %c20] : memref<4x404xf32, #tpu.memory_space<vmem>>, vector<4x20xf32>
    tpu.vector_store %arg4[%c0_30, %c20], %81 {strides = array<i32>} : memref<4x404xf32, #tpu.memory_space<vmem>>, vector<4x20xf32>,
    %83 = vector.extract_strided_slice %75 {offsets = [0, 320], sizes = [4, 20], strides = [1, 1]} : vector<4x400xf32> to vector<4x20xf32>
    %c0_31 = arith.constant 0 : index
    %c360 = arith.constant 360 : index
    %84 = vector.load %arg4[%c0_31, %c360] : memref<4x404xf32, #tpu.memory_space<vmem>>, vector<4x20xf32>
    tpu.vector_store %arg4[%c0_31, %c360], %83 {strides = array<i32>} : memref<4x404xf32, #tpu.memory_space<vmem>>, vector<4x20xf32>,
    %cst = arith.constant 0.000000e+00 : f32
    %85 = vector.broadcast %cst : f32 to vector<4x4xf32>
    %c0_32 = arith.constant 0 : index
    %c400 = arith.constant 400 : index
    %86 = vector.load %arg4[%c0_32, %c400] : memref<4x404xf32, #tpu.memory_space<vmem>>, vector<4x4xf32>
    tpu.vector_store %arg4[%c0_32, %c400], %85 {strides = array<i32>} : memref<4x404xf32, #tpu.memory_space<vmem>>, vector<4x4xf32>,
    %c0_33 = arith.constant 0 : index
    %c0_34 = arith.constant 0 : index
    %87 = vector.load %arg4[%c0_33, %c0_34] : memref<4x404xf32, #tpu.memory_space<vmem>>, vector<4x320xf32>
    %c0_35 = arith.constant 0 : index
    %c1 = arith.constant 1 : index
    %88 = vector.load %arg4[%c0_35, %c1] : memref<4x404xf32, #tpu.memory_space<vmem>>, vector<4x320xf32>
    %89 = tpu.concatenate %87, %88 in 0 : vector<4x320xf32>, vector<4x320xf32> -> vector<8x320xf32>
    %c0_36 = arith.constant 0 : index
    %c0_37 = arith.constant 0 : index
    %90 = vector.load %arg5[%c0_36, %c0_37] : memref<128x320xf32, #tpu.memory_space<vmem>>, vector<8x320xf32>
    tpu.vector_store %arg5[%c0_36, %c0_37], %89 {strides = array<i32>} : memref<128x320xf32, #tpu.memory_space<vmem>>, vector<8x320xf32>,
    %c0_38 = arith.constant 0 : index
    %c2 = arith.constant 2 : index
    %91 = vector.load %arg4[%c0_38, %c2] : memref<4x404xf32, #tpu.memory_space<vmem>>, vector<4x320xf32>
    %c0_39 = arith.constant 0 : index
    %c3 = arith.constant 3 : index
    %92 = vector.load %arg4[%c0_39, %c3] : memref<4x404xf32, #tpu.memory_space<vmem>>, vector<4x320xf32>
    %93 = tpu.concatenate %91, %92 in 0 : vector<4x320xf32>, vector<4x320xf32> -> vector<8x320xf32>
    %c8 = arith.constant 8 : index
    %c0_40 = arith.constant 0 : index
    %94 = vector.load %arg5[%c8, %c0_40] : memref<128x320xf32, #tpu.memory_space<vmem>>, vector<8x320xf32>
    tpu.vector_store %arg5[%c8, %c0_40], %93 {strides = array<i32>} : memref<128x320xf32, #tpu.memory_space<vmem>>, vector<8x320xf32>,
    %c0_41 = arith.constant 0 : index
    %c4 = arith.constant 4 : index
    %95 = vector.load %arg4[%c0_41, %c4] : memref<4x404xf32, #tpu.memory_space<vmem>>, vector<4x320xf32>
    %c0_42 = arith.constant 0 : index
    %c20_43 = arith.constant 20 : index
    %96 = vector.load %arg4[%c0_42, %c20_43] : memref<4x404xf32, #tpu.memory_space<vmem>>, vector<4x320xf32>
    %97 = tpu.concatenate %95, %96 in 0 : vector<4x320xf32>, vector<4x320xf32> -> vector<8x320xf32>
    %c16 = arith.constant 16 : index
    %c0_44 = arith.constant 0 : index
    %98 = vector.load %arg5[%c16, %c0_44] : memref<128x320xf32, #tpu.memory_space<vmem>>, vector<8x320xf32>
    tpu.vector_store %arg5[%c16, %c0_44], %97 {strides = array<i32>} : memref<128x320xf32, #tpu.memory_space<vmem>>, vector<8x320xf32>,
    %c0_45 = arith.constant 0 : index
    %c21 = arith.constant 21 : index
    %99 = vector.load %arg4[%c0_45, %c21] : memref<4x404xf32, #tpu.memory_space<vmem>>, vector<4x320xf32>
    %c0_46 = arith.constant 0 : index
    %c22 = arith.constant 22 : index
    %100 = vector.load %arg4[%c0_46, %c22] : memref<4x404xf32, #tpu.memory_space<vmem>>, vector<4x320xf32>
    %101 = tpu.concatenate %99, %100 in 0 : vector<4x320xf32>, vector<4x320xf32> -> vector<8x320xf32>
    %c24 = arith.constant 24 : index
    %c0_47 = arith.constant 0 : index
    %102 = vector.load %arg5[%c24, %c0_47] : memref<128x320xf32, #tpu.memory_space<vmem>>, vector<8x320xf32>
    tpu.vector_store %arg5[%c24, %c0_47], %101 {strides = array<i32>} : memref<128x320xf32, #tpu.memory_space<vmem>>, vector<8x320xf32>,
    %c0_48 = arith.constant 0 : index
    %c23 = arith.constant 23 : index
    %103 = vector.load %arg4[%c0_48, %c23] : memref<4x404xf32, #tpu.memory_space<vmem>>, vector<4x320xf32>
    %c0_49 = arith.constant 0 : index
    %c24_50 = arith.constant 24 : index
    %104 = vector.load %arg4[%c0_49, %c24_50] : memref<4x404xf32, #tpu.memory_space<vmem>>, vector<4x320xf32>
    %105 = tpu.concatenate %103, %104 in 0 : vector<4x320xf32>, vector<4x320xf32> -> vector<8x320xf32>
    %c32 = arith.constant 32 : index
    %c0_51 = arith.constant 0 : index
    %106 = vector.load %arg5[%c32, %c0_51] : memref<128x320xf32, #tpu.memory_space<vmem>>, vector<8x320xf32>
    tpu.vector_store %arg5[%c32, %c0_51], %105 {strides = array<i32>} : memref<128x320xf32, #tpu.memory_space<vmem>>, vector<8x320xf32>,
    %c0_52 = arith.constant 0 : index
    %c40 = arith.constant 40 : index
    %107 = vector.load %arg4[%c0_52, %c40] : memref<4x404xf32, #tpu.memory_space<vmem>>, vector<4x320xf32>
    %c0_53 = arith.constant 0 : index
    %c41 = arith.constant 41 : index
    %108 = vector.load %arg4[%c0_53, %c41] : memref<4x404xf32, #tpu.memory_space<vmem>>, vector<4x320xf32>
    %109 = tpu.concatenate %107, %108 in 0 : vector<4x320xf32>, vector<4x320xf32> -> vector<8x320xf32>
    %c40_54 = arith.constant 40 : index
    %c0_55 = arith.constant 0 : index
    %110 = vector.load %arg5[%c40_54, %c0_55] : memref<128x320xf32, #tpu.memory_space<vmem>>, vector<8x320xf32>
    tpu.vector_store %arg5[%c40_54, %c0_55], %109 {strides = array<i32>} : memref<128x320xf32, #tpu.memory_space<vmem>>, vector<8x320xf32>,
    %c0_56 = arith.constant 0 : index
    %c42_57 = arith.constant 42 : index
    %111 = vector.load %arg4[%c0_56, %c42_57] : memref<4x404xf32, #tpu.memory_space<vmem>>, vector<4x320xf32>
    %c0_58 = arith.constant 0 : index
    %c43 = arith.constant 43 : index
    %112 = vector.load %arg4[%c0_58, %c43] : memref<4x404xf32, #tpu.memory_space<vmem>>, vector<4x320xf32>
    %113 = tpu.concatenate %111, %112 in 0 : vector<4x320xf32>, vector<4x320xf32> -> vector<8x320xf32>
    %c48 = arith.constant 48 : index
    %c0_59 = arith.constant 0 : index
    %114 = vector.load %arg5[%c48, %c0_59] : memref<128x320xf32, #tpu.memory_space<vmem>>, vector<8x320xf32>
    tpu.vector_store %arg5[%c48, %c0_59], %113 {strides = array<i32>} : memref<128x320xf32, #tpu.memory_space<vmem>>, vector<8x320xf32>,
    %c0_60 = arith.constant 0 : index
    %c44 = arith.constant 44 : index
    %115 = vector.load %arg4[%c0_60, %c44] : memref<4x404xf32, #tpu.memory_space<vmem>>, vector<4x320xf32>
    %c0_61 = arith.constant 0 : index
    %c60 = arith.constant 60 : index
    %116 = vector.load %arg4[%c0_61, %c60] : memref<4x404xf32, #tpu.memory_space<vmem>>, vector<4x320xf32>
    %117 = tpu.concatenate %115, %116 in 0 : vector<4x320xf32>, vector<4x320xf32> -> vector<8x320xf32>
    %c56 = arith.constant 56 : index
    %c0_62 = arith.constant 0 : index
    %118 = vector.load %arg5[%c56, %c0_62] : memref<128x320xf32, #tpu.memory_space<vmem>>, vector<8x320xf32>
    tpu.vector_store %arg5[%c56, %c0_62], %117 {strides = array<i32>} : memref<128x320xf32, #tpu.memory_space<vmem>>, vector<8x320xf32>,
    %c0_63 = arith.constant 0 : index
    %c61 = arith.constant 61 : index
    %119 = vector.load %arg4[%c0_63, %c61] : memref<4x404xf32, #tpu.memory_space<vmem>>, vector<4x320xf32>
    %c0_64 = arith.constant 0 : index
    %c62_65 = arith.constant 62 : index
    %120 = vector.load %arg4[%c0_64, %c62_65] : memref<4x404xf32, #tpu.memory_space<vmem>>, vector<4x320xf32>
    %121 = tpu.concatenate %119, %120 in 0 : vector<4x320xf32>, vector<4x320xf32> -> vector<8x320xf32>
    %c64 = arith.constant 64 : index
    %c0_66 = arith.constant 0 : index
    %122 = vector.load %arg5[%c64, %c0_66] : memref<128x320xf32, #tpu.memory_space<vmem>>, vector<8x320xf32>
    tpu.vector_store %arg5[%c64, %c0_66], %121 {strides = array<i32>} : memref<128x320xf32, #tpu.memory_space<vmem>>, vector<8x320xf32>,
    %c0_67 = arith.constant 0 : index
    %c63 = arith.constant 63 : index
    %123 = vector.load %arg4[%c0_67, %c63] : memref<4x404xf32, #tpu.memory_space<vmem>>, vector<4x320xf32>
    %c0_68 = arith.constant 0 : index
    %c64_69 = arith.constant 64 : index
    %124 = vector.load %arg4[%c0_68, %c64_69] : memref<4x404xf32, #tpu.memory_space<vmem>>, vector<4x320xf32>
    %125 = tpu.concatenate %123, %124 in 0 : vector<4x320xf32>, vector<4x320xf32> -> vector<8x320xf32>
    %c72 = arith.constant 72 : index
    %c0_70 = arith.constant 0 : index
    %126 = vector.load %arg5[%c72, %c0_70] : memref<128x320xf32, #tpu.memory_space<vmem>>, vector<8x320xf32>
    tpu.vector_store %arg5[%c72, %c0_70], %125 {strides = array<i32>} : memref<128x320xf32, #tpu.memory_space<vmem>>, vector<8x320xf32>,
    %c0_71 = arith.constant 0 : index
    %c80 = arith.constant 80 : index
    %127 = vector.load %arg4[%c0_71, %c80] : memref<4x404xf32, #tpu.memory_space<vmem>>, vector<4x320xf32>
    %c0_72 = arith.constant 0 : index
    %c81 = arith.constant 81 : index
    %128 = vector.load %arg4[%c0_72, %c81] : memref<4x404xf32, #tpu.memory_space<vmem>>, vector<4x320xf32>
    %129 = tpu.concatenate %127, %128 in 0 : vector<4x320xf32>, vector<4x320xf32> -> vector<8x320xf32>
    %c80_73 = arith.constant 80 : index
    %c0_74 = arith.constant 0 : index
    %130 = vector.load %arg5[%c80_73, %c0_74] : memref<128x320xf32, #tpu.memory_space<vmem>>, vector<8x320xf32>
    tpu.vector_store %arg5[%c80_73, %c0_74], %129 {strides = array<i32>} : memref<128x320xf32, #tpu.memory_space<vmem>>, vector<8x320xf32>,
    %c0_75 = arith.constant 0 : index
    %c82_76 = arith.constant 82 : index
    %131 = vector.load %arg4[%c0_75, %c82_76] : memref<4x404xf32, #tpu.memory_space<vmem>>, vector<4x320xf32>
    %c0_77 = arith.constant 0 : index
    %c83 = arith.constant 83 : index
    %132 = vector.load %arg4[%c0_77, %c83] : memref<4x404xf32, #tpu.memory_space<vmem>>, vector<4x320xf32>
    %133 = tpu.concatenate %131, %132 in 0 : vector<4x320xf32>, vector<4x320xf32> -> vector<8x320xf32>
    %c88 = arith.constant 88 : index
    %c0_78 = arith.constant 0 : index
    %134 = vector.load %arg5[%c88, %c0_78] : memref<128x320xf32, #tpu.memory_space<vmem>>, vector<8x320xf32>
    tpu.vector_store %arg5[%c88, %c0_78], %133 {strides = array<i32>} : memref<128x320xf32, #tpu.memory_space<vmem>>, vector<8x320xf32>,
    %c0_79 = arith.constant 0 : index
    %c84 = arith.constant 84 : index
    %135 = vector.load %arg4[%c0_79, %c84] : memref<4x404xf32, #tpu.memory_space<vmem>>, vector<4x320xf32>
    %c96 = arith.constant 96 : index
    %c0_80 = arith.constant 0 : index
    %136 = vector.load %arg5[%c96, %c0_80] : memref<128x320xf32, #tpu.memory_space<vmem>>, vector<4x320xf32>
    tpu.vector_store %arg5[%c96, %c0_80], %135 {strides = array<i32>} : memref<128x320xf32, #tpu.memory_space<vmem>>, vector<4x320xf32>,
    %cst_81 = arith.constant 0.000000e+00 : f32
    %137 = vector.broadcast %cst_81 : f32 to vector<28x320xf32>
    %c100 = arith.constant 100 : index
    %c0_82 = arith.constant 0 : index
    %138 = vector.load %arg5[%c100, %c0_82] : memref<128x320xf32, #tpu.memory_space<vmem>>, vector<28x320xf32>
    tpu.vector_store %arg5[%c100, %c0_82], %137 {strides = array<i32>} : memref<128x320xf32, #tpu.memory_space<vmem>>, vector<28x320xf32>,
    %c0_83 = arith.constant 0 : index
    %c0_84 = arith.constant 0 : index
    %139 = vector.load %arg2[%c0_83, %c0_84] : memref<4x128xf32, #tpu.memory_space<vmem>>, vector<4x128xf32>
    %c0_85 = arith.constant 0 : index
    %c0_86 = arith.constant 0 : index
    %140 = vector.load %arg5[%c0_85, %c0_86] : memref<128x320xf32, #tpu.memory_space<vmem>>, vector<128x320xf32>
    %cst_87 = arith.constant dense<0.000000e+00> : vector<4x320xf32>
    %141 = tpu.matmul %139, %140, %cst_87 {dimension_numbers = #tpu.dot_dimension_numbers<[1], [0], [0], [1], [0, 0, 1, 1], [], []>} : vector<4x128xf32>, vector<128x320xf32>, vector<4x320xf32> -> vector<4x320xf32>
    %142 = tpu.iota {dimensions = array<i32: 1>} : vector<1x320xi32>
    %c20_i32_88 = arith.constant 20 : i32
    %c0_i32_89 = arith.constant 0 : i32
    %143 = arith.cmpi eq, %c20_i32_88, %c0_i32_89 : i32
    %c1_i32_90 = arith.constant 1 : i32
    %144 = arith.select %143, %c1_i32_90, %c20_i32_88 : i32
    %145 = vector.broadcast %144 : i32 to vector<1x320xi32>
    %146 = arith.remsi %142, %145 : vector<1x320xi32>
    %c0_i32_91 = arith.constant 0 : i32
    %147 = vector.broadcast %c0_i32_91 : i32 to vector<1x320xi32>
    %148 = arith.cmpi ne, %146, %147 : vector<1x320xi32>
    %c0_i32_92 = arith.constant 0 : i32
    %149 = vector.broadcast %c0_i32_92 : i32 to vector<1x320xi32>
    %150 = arith.cmpi slt, %146, %149 : vector<1x320xi32>
    %c0_i32_93 = arith.constant 0 : i32
    %151 = arith.cmpi slt, %144, %c0_i32_93 : i32
    %152 = vector.broadcast %151 : i1 to vector<1x320xi1>
    %153 = vector.broadcast %152 : vector<1x320xi1> to vector<1x320xi1>
    %154 = arith.xori %150, %153 : vector<1x320xi1>
    %155 = arith.andi %154, %148 : vector<1x320xi1>
    %156 = vector.broadcast %144 : i32 to vector<1x320xi32>
    %157 = arith.addi %146, %156 : vector<1x320xi32>
    %158 = arith.select %155, %157, %146 : vector<1x320xi1>, vector<1x320xi32>
    %c16_i32 = arith.constant 16 : i32
    %159 = vector.broadcast %c16_i32 : i32 to vector<1x320xi32>
    %160 = arith.cmpi slt, %158, %159 : vector<1x320xi32>
    %161 = arith.extui %160 : vector<1x320xi1> to vector<1x320xi32>
    %162 = arith.sitofp %161 : vector<1x320xi32> to vector<1x320xf32>
    %163 = vector.broadcast %162 : vector<1x320xf32> to vector<4x320xf32>
    %164 = arith.mulf %141, %163 : vector<4x320xf32>
    %cst_94 = arith.constant dense<0.000000e+00> : vector<4xf32>
    %165 = vector.multi_reduction <add>, %164, %cst_94 [1] : vector<4x320xf32> to vector<4xf32>
    %166 = vector.shape_cast %165 : vector<4xf32> to vector<4x1xf32>
    %cst_95 = arith.constant 3.906250e-03 : f32
    %167 = vector.broadcast %cst_95 : f32 to vector<4x1xf32>
    %168 = arith.mulf %166, %167 : vector<4x1xf32>
    %169 = arith.mulf %164, %141 : vector<4x320xf32>
    %cst_96 = arith.constant dense<0.000000e+00> : vector<4xf32>
    %170 = vector.multi_reduction <add>, %169, %cst_96 [1] : vector<4x320xf32> to vector<4xf32>
    %171 = vector.shape_cast %170 : vector<4xf32> to vector<4x1xf32>
    %cst_97 = arith.constant 3.906250e-03 : f32
    %172 = vector.broadcast %cst_97 : f32 to vector<4x1xf32>
    %173 = arith.mulf %171, %172 : vector<4x1xf32>
    %174 = arith.mulf %168, %168 : vector<4x1xf32>
    %175 = arith.subf %173, %174 : vector<4x1xf32>
    %176 = vector.broadcast %168 : vector<4x1xf32> to vector<4x320xf32>
    %177 = arith.subf %141, %176 : vector<4x320xf32>
    %cst_98 = arith.constant 9.99999974E-6 : f32
    %178 = vector.broadcast %cst_98 : f32 to vector<4x1xf32>
    %179 = arith.addf %175, %178 : vector<4x1xf32>
    %180 = math.rsqrt %179 : vector<4x1xf32>
    %181 = vector.broadcast %180 : vector<4x1xf32> to vector<4x320xf32>
    %182 = arith.mulf %177, %181 : vector<4x320xf32>
    %183 = vector.extract_strided_slice %182 {offsets = [0, 0], sizes = [4, 16], strides = [1, 1]} : vector<4x320xf32> to vector<4x16xf32>
    %c0_99 = arith.constant 0 : index
    %c0_100 = arith.constant 0 : index
    %c0_101 = arith.constant 0 : index
    %184 = vector.load %arg3[%c0_99, %c0_100, %c0_101] : memref<1x4x256xf32, #tpu.memory_space<vmem>>, vector<1x4x16xf32>
    %185 = vector.shape_cast %184 : vector<1x4x16xf32> to vector<4x16xf32>
    %186 = vector.shape_cast %183 : vector<4x16xf32> to vector<1x4x16xf32>
    tpu.vector_store %arg3[%c0_99, %c0_100, %c0_101], %186 {strides = array<i32>} : memref<1x4x256xf32, #tpu.memory_space<vmem>>, vector<1x4x16xf32>,
    %187 = vector.extract_strided_slice %182 {offsets = [0, 20], sizes = [4, 16], strides = [1, 1]} : vector<4x320xf32> to vector<4x16xf32>
    %c0_102 = arith.constant 0 : index
    %c0_103 = arith.constant 0 : index
    %c16_104 = arith.constant 16 : index
    %188 = vector.load %arg3[%c0_102, %c0_103, %c16_104] : memref<1x4x256xf32, #tpu.memory_space<vmem>>, vector<1x4x16xf32>
    %189 = vector.shape_cast %188 : vector<1x4x16xf32> to vector<4x16xf32>
    %190 = vector.shape_cast %187 : vector<4x16xf32> to vector<1x4x16xf32>
    tpu.vector_store %arg3[%c0_102, %c0_103, %c16_104], %190 {strides = array<i32>} : memref<1x4x256xf32, #tpu.memory_space<vmem>>, vector<1x4x16xf32>,
    %191 = vector.extract_strided_slice %182 {offsets = [0, 40], sizes = [4, 16], strides = [1, 1]} : vector<4x320xf32> to vector<4x16xf32>
    %c0_105 = arith.constant 0 : index
    %c0_106 = arith.constant 0 : index
    %c32_107 = arith.constant 32 : index
    %192 = vector.load %arg3[%c0_105, %c0_106, %c32_107] : memref<1x4x256xf32, #tpu.memory_space<vmem>>, vector<1x4x16xf32>
    %193 = vector.shape_cast %192 : vector<1x4x16xf32> to vector<4x16xf32>
    %194 = vector.shape_cast %191 : vector<4x16xf32> to vector<1x4x16xf32>
    tpu.vector_store %arg3[%c0_105, %c0_106, %c32_107], %194 {strides = array<i32>} : memref<1x4x256xf32, #tpu.memory_space<vmem>>, vector<1x4x16xf32>,
    %195 = vector.extract_strided_slice %182 {offsets = [0, 60], sizes = [4, 16], strides = [1, 1]} : vector<4x320xf32> to vector<4x16xf32>
    %c0_108 = arith.constant 0 : index
    %c0_109 = arith.constant 0 : index
    %c48_110 = arith.constant 48 : index
    %196 = vector.load %arg3[%c0_108, %c0_109, %c48_110] : memref<1x4x256xf32, #tpu.memory_space<vmem>>, vector<1x4x16xf32>
    %197 = vector.shape_cast %196 : vector<1x4x16xf32> to vector<4x16xf32>
    %198 = vector.shape_cast %195 : vector<4x16xf32> to vector<1x4x16xf32>
    tpu.vector_store %arg3[%c0_108, %c0_109, %c48_110], %198 {strides = array<i32>} : memref<1x4x256xf32, #tpu.memory_space<vmem>>, vector<1x4x16xf32>,
    %199 = vector.extract_strided_slice %182 {offsets = [0, 80], sizes = [4, 16], strides = [1, 1]} : vector<4x320xf32> to vector<4x16xf32>
    %c0_111 = arith.constant 0 : index
    %c0_112 = arith.constant 0 : index
    %c64_113 = arith.constant 64 : index
    %200 = vector.load %arg3[%c0_111, %c0_112, %c64_113] : memref<1x4x256xf32, #tpu.memory_space<vmem>>, vector<1x4x16xf32>
    %201 = vector.shape_cast %200 : vector<1x4x16xf32> to vector<4x16xf32>
    %202 = vector.shape_cast %199 : vector<4x16xf32> to vector<1x4x16xf32>
    tpu.vector_store %arg3[%c0_111, %c0_112, %c64_113], %202 {strides = array<i32>} : memref<1x4x256xf32, #tpu.memory_space<vmem>>, vector<1x4x16xf32>,
    %203 = vector.extract_strided_slice %182 {offsets = [0, 100], sizes = [4, 16], strides = [1, 1]} : vector<4x320xf32> to vector<4x16xf32>
    %c0_114 = arith.constant 0 : index
    %c0_115 = arith.constant 0 : index
    %c80_116 = arith.constant 80 : index
    %204 = vector.load %arg3[%c0_114, %c0_115, %c80_116] : memref<1x4x256xf32, #tpu.memory_space<vmem>>, vector<1x4x16xf32>
    %205 = vector.shape_cast %204 : vector<1x4x16xf32> to vector<4x16xf32>
    %206 = vector.shape_cast %203 : vector<4x16xf32> to vector<1x4x16xf32>
    tpu.vector_store %arg3[%c0_114, %c0_115, %c80_116], %206 {strides = array<i32>} : memref<1x4x256xf32, #tpu.memory_space<vmem>>, vector<1x4x16xf32>,
    %207 = vector.extract_strided_slice %182 {offsets = [0, 120], sizes = [4, 16], strides = [1, 1]} : vector<4x320xf32> to vector<4x16xf32>
    %c0_117 = arith.constant 0 : index
    %c0_118 = arith.constant 0 : index
    %c96_119 = arith.constant 96 : index
    %208 = vector.load %arg3[%c0_117, %c0_118, %c96_119] : memref<1x4x256xf32, #tpu.memory_space<vmem>>, vector<1x4x16xf32>
    %209 = vector.shape_cast %208 : vector<1x4x16xf32> to vector<4x16xf32>
    %210 = vector.shape_cast %207 : vector<4x16xf32> to vector<1x4x16xf32>
    tpu.vector_store %arg3[%c0_117, %c0_118, %c96_119], %210 {strides = array<i32>} : memref<1x4x256xf32, #tpu.memory_space<vmem>>, vector<1x4x16xf32>,
    %211 = vector.extract_strided_slice %182 {offsets = [0, 140], sizes = [4, 16], strides = [1, 1]} : vector<4x320xf32> to vector<4x16xf32>
    %c0_120 = arith.constant 0 : index
    %c0_121 = arith.constant 0 : index
    %c112 = arith.constant 112 : index
    %212 = vector.load %arg3[%c0_120, %c0_121, %c112] : memref<1x4x256xf32, #tpu.memory_space<vmem>>, vector<1x4x16xf32>
    %213 = vector.shape_cast %212 : vector<1x4x16xf32> to vector<4x16xf32>
    %214 = vector.shape_cast %211 : vector<4x16xf32> to vector<1x4x16xf32>
    tpu.vector_store %arg3[%c0_120, %c0_121, %c112], %214 {strides = array<i32>} : memref<1x4x256xf32, #tpu.memory_space<vmem>>, vector<1x4x16xf32>,
    %215 = vector.extract_strided_slice %182 {offsets = [0, 160], sizes = [4, 16], strides = [1, 1]} : vector<4x320xf32> to vector<4x16xf32>
    %c0_122 = arith.constant 0 : index
    %c0_123 = arith.constant 0 : index
    %c128 = arith.constant 128 : index
    %216 = vector.load %arg3[%c0_122, %c0_123, %c128] : memref<1x4x256xf32, #tpu.memory_space<vmem>>, vector<1x4x16xf32>
    %217 = vector.shape_cast %216 : vector<1x4x16xf32> to vector<4x16xf32>
    %218 = vector.shape_cast %215 : vector<4x16xf32> to vector<1x4x16xf32>
    tpu.vector_store %arg3[%c0_122, %c0_123, %c128], %218 {strides = array<i32>} : memref<1x4x256xf32, #tpu.memory_space<vmem>>, vector<1x4x16xf32>,
    %219 = vector.extract_strided_slice %182 {offsets = [0, 180], sizes = [4, 16], strides = [1, 1]} : vector<4x320xf32> to vector<4x16xf32>
    %c0_124 = arith.constant 0 : index
    %c0_125 = arith.constant 0 : index
    %c144 = arith.constant 144 : index
    %220 = vector.load %arg3[%c0_124, %c0_125, %c144] : memref<1x4x256xf32, #tpu.memory_space<vmem>>, vector<1x4x16xf32>
    %221 = vector.shape_cast %220 : vector<1x4x16xf32> to vector<4x16xf32>
    %222 = vector.shape_cast %219 : vector<4x16xf32> to vector<1x4x16xf32>
    tpu.vector_store %arg3[%c0_124, %c0_125, %c144], %222 {strides = array<i32>} : memref<1x4x256xf32, #tpu.memory_space<vmem>>, vector<1x4x16xf32>,
    %223 = vector.extract_strided_slice %182 {offsets = [0, 200], sizes = [4, 16], strides = [1, 1]} : vector<4x320xf32> to vector<4x16xf32>
    %c0_126 = arith.constant 0 : index
    %c0_127 = arith.constant 0 : index
    %c160 = arith.constant 160 : index
    %224 = vector.load %arg3[%c0_126, %c0_127, %c160] : memref<1x4x256xf32, #tpu.memory_space<vmem>>, vector<1x4x16xf32>
    %225 = vector.shape_cast %224 : vector<1x4x16xf32> to vector<4x16xf32>
    %226 = vector.shape_cast %223 : vector<4x16xf32> to vector<1x4x16xf32>
    tpu.vector_store %arg3[%c0_126, %c0_127, %c160], %226 {strides = array<i32>} : memref<1x4x256xf32, #tpu.memory_space<vmem>>, vector<1x4x16xf32>,
    %227 = vector.extract_strided_slice %182 {offsets = [0, 220], sizes = [4, 16], strides = [1, 1]} : vector<4x320xf32> to vector<4x16xf32>
    %c0_128 = arith.constant 0 : index
    %c0_129 = arith.constant 0 : index
    %c176 = arith.constant 176 : index
    %228 = vector.load %arg3[%c0_128, %c0_129, %c176] : memref<1x4x256xf32, #tpu.memory_space<vmem>>, vector<1x4x16xf32>
    %229 = vector.shape_cast %228 : vector<1x4x16xf32> to vector<4x16xf32>
    %230 = vector.shape_cast %227 : vector<4x16xf32> to vector<1x4x16xf32>
    tpu.vector_store %arg3[%c0_128, %c0_129, %c176], %230 {strides = array<i32>} : memref<1x4x256xf32, #tpu.memory_space<vmem>>, vector<1x4x16xf32>,
    %231 = vector.extract_strided_slice %182 {offsets = [0, 240], sizes = [4, 16], strides = [1, 1]} : vector<4x320xf32> to vector<4x16xf32>
    %c0_130 = arith.constant 0 : index
    %c0_131 = arith.constant 0 : index
    %c192 = arith.constant 192 : index
    %232 = vector.load %arg3[%c0_130, %c0_131, %c192] : memref<1x4x256xf32, #tpu.memory_space<vmem>>, vector<1x4x16xf32>
    %233 = vector.shape_cast %232 : vector<1x4x16xf32> to vector<4x16xf32>
    %234 = vector.shape_cast %231 : vector<4x16xf32> to vector<1x4x16xf32>
    tpu.vector_store %arg3[%c0_130, %c0_131, %c192], %234 {strides = array<i32>} : memref<1x4x256xf32, #tpu.memory_space<vmem>>, vector<1x4x16xf32>,
    %235 = vector.extract_strided_slice %182 {offsets = [0, 260], sizes = [4, 16], strides = [1, 1]} : vector<4x320xf32> to vector<4x16xf32>
    %c0_132 = arith.constant 0 : index
    %c0_133 = arith.constant 0 : index
    %c208 = arith.constant 208 : index
    %236 = vector.load %arg3[%c0_132, %c0_133, %c208] : memref<1x4x256xf32, #tpu.memory_space<vmem>>, vector<1x4x16xf32>
    %237 = vector.shape_cast %236 : vector<1x4x16xf32> to vector<4x16xf32>
    %238 = vector.shape_cast %235 : vector<4x16xf32> to vector<1x4x16xf32>
    tpu.vector_store %arg3[%c0_132, %c0_133, %c208], %238 {strides = array<i32>} : memref<1x4x256xf32, #tpu.memory_space<vmem>>, vector<1x4x16xf32>,
    %239 = vector.extract_strided_slice %182 {offsets = [0, 280], sizes = [4, 16], strides = [1, 1]} : vector<4x320xf32> to vector<4x16xf32>
    %c0_134 = arith.constant 0 : index
    %c0_135 = arith.constant 0 : index
    %c224 = arith.constant 224 : index
    %240 = vector.load %arg3[%c0_134, %c0_135, %c224] : memref<1x4x256xf32, #tpu.memory_space<vmem>>, vector<1x4x16xf32>
    %241 = vector.shape_cast %240 : vector<1x4x16xf32> to vector<4x16xf32>
    %242 = vector.shape_cast %239 : vector<4x16xf32> to vector<1x4x16xf32>
    tpu.vector_store %arg3[%c0_134, %c0_135, %c224], %242 {strides = array<i32>} : memref<1x4x256xf32, #tpu.memory_space<vmem>>, vector<1x4x16xf32>,
    %243 = vector.extract_strided_slice %182 {offsets = [0, 300], sizes = [4, 16], strides = [1, 1]} : vector<4x320xf32> to vector<4x16xf32>
    %c0_136 = arith.constant 0 : index
    %c0_137 = arith.constant 0 : index
    %c240 = arith.constant 240 : index
    %244 = vector.load %arg3[%c0_136, %c0_137, %c240] : memref<1x4x256xf32, #tpu.memory_space<vmem>>, vector<1x4x16xf32>
    %245 = vector.shape_cast %244 : vector<1x4x16xf32> to vector<4x16xf32>
    %246 = vector.shape_cast %243 : vector<4x16xf32> to vector<1x4x16xf32>
    tpu.vector_store %arg3[%c0_136, %c0_137, %c240], %246 {strides = array<i32>} : memref<1x4x256xf32, #tpu.memory_space<vmem>>, vector<1x4x16xf32>,
    return
  }
  func.func @transform_0(%arg0: i32) -> (i32, i32, i32) {
    %c0_i32 = arith.constant 0 : i32
    %c0_i32_0 = arith.constant 0 : i32
    %c0_i32_1 = arith.constant 0 : i32
    return %arg0, %c0_i32, %c0_i32_0 : i32, i32, i32
  }
  func.func @transform_1(%arg0: i32) -> (i32, i32) {
    %c0_i32 = arith.constant 0 : i32
    %c0_i32_0 = arith.constant 0 : i32
    %c0_i32_1 = arith.constant 0 : i32
    return %c0_i32, %c0_i32_0 : i32, i32
  }
  func.func @transform_2(%arg0: i32) -> (i32, i32, i32) {
    %c0_i32 = arith.constant 0 : i32
    %c0_i32_0 = arith.constant 0 : i32
    %c0_i32_1 = arith.constant 0 : i32
    return %arg0, %c0_i32, %c0_i32_0 : i32, i32, i32
  }
}

</mosaic_0001>

<llo_original>
// kernel: resnet_block_forward.1
$region0: #{resnet_block_forward.1}
  #allocation0 [shape = 'u32[]', space=smem, size = 0x4, offset = 0x4, fixed_abs, tag = 'smem constant byte address 0x4 - core index']
  #allocation1 [shape = 'u32[144,128]{1,0:T(1,128)}', space=vmem, size = 0x12000, scoped, tag = 'internal scratch']
  #allocation2 [shape = 'f32[4,404]{1,0:T(4,128)}', space=vmem, size = 0x2000, scoped, tag = 'scratch operand']
  #allocation3 [shape = 'f32[128,320]{1,0:T(8,128)}', space=vmem, size = 0x30000, scoped, tag = 'scratch operand']
  %s0 = inlined_call_operand.vmem [shape: f32[2,4,256], index: 0, kind: input, shape index: {}]
  %s1 = inlined_call_operand.vmem [shape: f32[4,128], index: 1, kind: input, shape index: {}]
  %s2 = inlined_call_operand.vmem [shape: f32[2,4,256], index: 2, kind: output, shape index: {}]
  %s3 = sld [smem:[#allocation0]]
  $region41: #{resnet_block_forward.1} parent=0
    _
  %s5 = ssub.s32 1, %s3
  %s6 = scalar_select 0, %s5, %s3
  loop: start=0, step=1, limit=4
  $region2: #{resnet_block_forward.1} parent=0 // loop_pre_header
    _
  $region3: #{resnet_block_forward.1} parent=0 // loop_header
    %s8 = sphi 0, %s12
    %p9 = scmp.ge.s32.totalorder %s8, 4
    %s18 = sphi 0, %s20
    %s21 = sphi 0, %s18
    %s22 = sphi 0, %s21
    %s38 = sphi 0, %s22
    %s42 = sphi 0, %s42
    %s44 = sphi 0, %s42
    %s45 = sphi 0, %s44
    %s59 = sphi 0, %s45
    %s65 = sphi 0, %s67
    %s68 = sphi 0, %s65
    %s69 = sphi 0, %s68
    %s85 = sphi 0, %s69
  $region4: #{resnet_block_forward.1} parent=0 // loop_header_branch
    %11 = sbr.rel (%p9) target = $region8
  $region5: #{resnet_block_forward.1} parent=0 // loop_body
    %s13 = ssub.s32 %s8, 1
    %s14 = ssub.s32 %s8, 2
    %s15 = sadd.s32 %s8, 1
    %s16 = ssub.s32 %s8, %s15
    %p17 = scmp.eq.s32.totalorder %s16, 0
    %s19 = sadd.s32 %s18, 1
    %s20 = scalar_select %p17, %s18, %s19
    %p23 = pneg %p17
    %p24 = scmp.eq.s32.totalorder %s8, 1
    %p25 = por %p23, %p24
    %p26 = scmp.ne.s32.totalorder %s18, %s21
    %p27 = scmp.eq.s32.totalorder %s8, 0
    %p28 = por %p26, %p27
    %p29 = scmp.ne.s32.totalorder %s18, %s21
    %p30 = scmp.eq.s32.totalorder %s13, 1
    %p31 = por %p29, %p30
    %p32 = scmp.ne.s32.totalorder %s21, %s22
    %p33 = scmp.eq.s32.totalorder %s13, 0
    %p34 = por %p32, %p33
    %p35 = scmp.ne.s32.totalorder %s21, %s22
    %p36 = scmp.eq.s32.totalorder %s14, 1
    %p37 = por %p35, %p36
    %p39 = scmp.ne.s32.totalorder %s22, %s38
    %p40 = scmp.eq.s32.totalorder %s14, 0
    %p41 = por %p39, %p40
    %s43 = sadd.s32 %s42, 1
    %p46 = scmp.eq.s32.totalorder %s8, 1
    %p47 = scmp.ne.s32.totalorder %s42, %s44
    %p48 = scmp.eq.s32.totalorder %s8, 0
    %p49 = por %p47, %p48
    %p50 = scmp.ne.s32.totalorder %s42, %s44
    %p51 = scmp.eq.s32.totalorder %s13, 1
    %p52 = por %p50, %p51
    %p53 = scmp.ne.s32.totalorder %s44, %s45
    %p54 = scmp.eq.s32.totalorder %s13, 0
    %p55 = por %p53, %p54
    %p56 = scmp.ne.s32.totalorder %s44, %s45
    %p57 = scmp.eq.s32.totalorder %s14, 1
    %p58 = por %p56, %p57
    %p60 = scmp.ne.s32.totalorder %s45, %s59
    %p61 = scmp.eq.s32.totalorder %s14, 0
    %p62 = por %p60, %p61
    %s63 = ssub.s32 %s8, %s15
    %p64 = scmp.eq.s32.totalorder %s63, 0
    %s66 = sadd.s32 %s65, 1
    %s67 = scalar_select %p64, %s65, %s66
    %p70 = pneg %p64
    %p71 = scmp.eq.s32.totalorder %s8, 1
    %p72 = por %p70, %p71
    %p73 = scmp.ne.s32.totalorder %s65, %s68
    %p74 = scmp.eq.s32.totalorder %s8, 0
    %p75 = por %p73, %p74
    %p76 = scmp.ne.s32.totalorder %s65, %s68
    %p77 = scmp.eq.s32.totalorder %s13, 1
    %p78 = por %p76, %p77
    %p79 = scmp.ne.s32.totalorder %s68, %s69
    %p80 = scmp.eq.s32.totalorder %s13, 0
    %p81 = por %p79, %p80
    %p82 = scmp.ne.s32.totalorder %s68, %s69
    %p83 = scmp.eq.s32.totalorder %s14, 1
    %p84 = por %p82, %p83
    %p86 = scmp.ne.s32.totalorder %s69, %s85
    %p87 = scmp.eq.s32.totalorder %s14, 0
    %p88 = por %p86, %p87
    %p89 = scmp.le.s32.totalorder 1, %s8
    %p90 = scmp.lt.s32.totalorder %s8, 3
    %p91 = pnand %p89, %p90
    %p92 = pneg %p91
    // Predicated region
    $region9: #{resnet_block_forward.1} parent=5 // pred_check
      _
    $region10: #{resnet_block_forward.1} parent=5 // pred_check_branch
      %94 = sbr.rel (%p91) target = $region12
    $region11: #{resnet_block_forward.1} parent=5 // pred_region
      %s95 = ssub.s32 %s8, 1
      // Predicated region
      $region13: #{resnet_block_forward.1} parent=11 // pred_check
        %p96 = pneg %p55
      $region14: #{resnet_block_forward.1} parent=11 // pred_check_branch
        %98 = sbr.rel (%p96) target = $region16
      $region15: #{resnet_block_forward.1} parent=11 // pred_region
        _
      $region16: #{resnet_block_forward.1} parent=11 // pred_fallthru
        _
    $region12: #{resnet_block_forward.1} parent=5 // pred_fallthru
      _
    %p99 = scmp.lt.s32.totalorder %s8, 2
    // Predicated region
    $region17: #{resnet_block_forward.1} parent=5 // pred_check
      %p100 = pneg %p99
    $region18: #{resnet_block_forward.1} parent=5 // pred_check_branch
      %102 = sbr.rel (%p100) target = $region20
    $region19: #{resnet_block_forward.1} parent=5 // pred_region
      // Predicated region
      $region21: #{resnet_block_forward.1} parent=19 // pred_check
        %p103 = pneg %p28
      $region22: #{resnet_block_forward.1} parent=19 // pred_check_branch
        %105 = sbr.rel (%p103) target = $region24
      $region23: #{resnet_block_forward.1} parent=19 // pred_region
        %p106 = scmp.lt.s32.totalorder %s8, 1
        %s107 = scalar_select %p106, %s8, 1
        %s108 = smul.addr %s107, 2
        %s109 = smul.addr %s108, 4
        %s110 = scalar_lea.vmem %s0, %s109
      $region24: #{resnet_block_forward.1} parent=19 // pred_fallthru
        _
    $region20: #{resnet_block_forward.1} parent=5 // pred_fallthru
      _
    %p111 = scmp.le.s32.totalorder 1, %s8
    %p112 = scmp.lt.s32.totalorder %s8, 3
    %p113 = pnand %p111, %p112
    %p114 = pneg %p113
    // Predicated region
    $region25: #{resnet_block_forward.1} parent=5 // pred_check
      _
    $region26: #{resnet_block_forward.1} parent=5 // pred_check_branch
      %116 = sbr.rel (%p113) target = $region28
    $region27: #{resnet_block_forward.1} parent=5 // pred_region
      %s117 = ssub.s32 %s8, 1
      %p118 = scmp.lt.s32.totalorder %s13, 1
      %s119 = scalar_select %p118, %s13, 1
      %s120 = smul.addr %s119, 2
      %s121 = smul.addr %s120, 4
      %s122 = scalar_lea.vmem %s0, %s121
      %p123 = pneg %p34
      %p124 = pneg %p31
      %p125 = pneg %p55
      %p126 = pneg %p52
      %p127 = pneg %p81
      %p128 = pneg %p78
      %p129 = scmp.lt.s32.totalorder %s13, 1
      %s130 = scalar_select %p129, %s13, 1
      %s131 = smul.addr %s130, 2
      %s132 = smul.addr %s131, 4
      %s133 = scalar_lea.vmem %s2, %s132
      %p134 = scmp.lt.s32.totalorder %s13, 1
      %s135 = scalar_select %p134, %s13, 1
      %s136 = smul.addr %s135, 2
      %s137 = smul.addr %s136, 4
      %s138 = scalar_lea.vmem %s0, %s137
      %p139 = scmp.lt.s32.totalorder %s13, 1
      %s140 = scalar_select %p139, %s13, 1
      %s141 = smul.addr %s140, 2
      %s142 = smul.addr %s141, 4
      %s143 = scalar_lea.vmem %s2, %s142
      %v144 = vld [vmem:[%s138] sm:$0xff]
      %146 = vrot.lane.b32.xlu0 %v144, 42
      %v147 = vpop.permute.xlu0 %146
      %vm149 = vcmask 470352
      %150 = vst.msk [vmem:[#allocation2] sm:$0xf] %vm149, %v147
      %151 = vrot.lane.b32.xlu0 %v144, 46
      %v152 = vpop.permute.xlu0 %151
      %vm154 = vcmask 634352
      %155 = vst.msk [vmem:[#allocation2] sm:$0xf] %vm154, %v152
      %156 = vrot.lane.b32.xlu0 %v144, 50
      %v157 = vpop.permute.xlu0 %156
      %vm159 = vcmask 798352
      %160 = vst.msk [vmem:[#allocation2] sm:$0xf] %vm159, %v157
      %161 = vrot.lane.b32.xlu0 %v144, 54
      %v162 = vpop.permute.xlu0 %161
      %vm164 = vcmask 962352
      %165 = vst.msk [vmem:[#allocation2] sm:$0xf] %vm164, %v162
      %166 = vrot.lane.b32.xlu0 %v144, 58
      %v167 = vpop.permute.xlu0 %166
      %v168 = vrot.slane %v167, 4
      %vm169 = vcmask 474112
      %v170 = vsel %vm169, %v168, %v167
      %vm172 = vcmask 1044432
      %vm173 = vcmask 80900
      %vm174 = vmor %vm173, %vm172
      %175 = vst.msk [vmem:[#allocation2] sm:$0xff] %vm174, %v170
      %176 = vrot.lane.b32.xlu0 %v144, 62
      %v177 = vpop.permute.xlu0 %176
      %vm179 = vcmask 240752
      %180 = vst.msk [vmem:[#allocation2 + $0x4] sm:$0xf] %vm179, %v177
      %181 = vrot.lane.b32.xlu0 %v144, 66
      %v182 = vpop.permute.xlu0 %181
      %vm184 = vcmask 404752
      %185 = vst.msk [vmem:[#allocation2 + $0x4] sm:$0xf] %vm184, %v182
      %186 = vrot.lane.b32.xlu0 %v144, 70
      %v187 = vpop.permute.xlu0 %186
      %vm189 = vcmask 568752
      %190 = vst.msk [vmem:[#allocation2 + $0x4] sm:$0xf] %vm189, %v187
      %191 = vrot.lane.b32.xlu0 %v144, 74
      %v192 = vpop.permute.xlu0 %191
      %v193 = vrot.slane %v192, 4
      %vm194 = vcmask 605184
      %v195 = vsel %vm194, %v192, %v193
      %vm197 = vcmask 732752
      %198 = vst.msk [vmem:[#allocation2 + $0x4] sm:$0xf] %vm197, %v195
      %199 = vrot.lane.b32.xlu0 %v144, 78
      %v200 = vpop.permute.xlu0 %199
      %v201 = vrot.slane %v200, 4
      %vm202 = vcmask 637952
      %v203 = vsel %vm202, %v200, %v201
      %vm205 = vcmask 896752
      %206 = vst.msk [vmem:[#allocation2 + $0x4] sm:$0xf] %vm205, %v203
      %207 = vrot.lane.b32.xlu0 %v144, 82
      %v208 = vpop.permute.xlu0 %207
      %v209 = vrot.slane %v208, 4
      %vm210 = vcmask 670720
      %v211 = vsel %vm210, %v208, %v209
      %vm213 = vcmask 1044368
      %vm214 = vcmask 15364
      %vm215 = vmor %vm214, %vm213
      %216 = vst.msk [vmem:[#allocation2 + $0x4] sm:$0xff] %vm215, %v211
      %217 = vrot.lane.b32.xlu0 %v144, 86
      %v218 = vpop.permute.xlu0 %217
      %v219 = vrot.slane %v218, 4
      %vm221 = vcmask 175152
      %222 = vst.msk [vmem:[#allocation2 + $0x8] sm:$0xf] %vm221, %v219
      %223 = vrot.lane.b32.xlu0 %v144, 90
      %v224 = vpop.permute.xlu0 %223
      %v225 = vrot.slane %v224, 4
      %vm227 = vcmask 339152
      %228 = vst.msk [vmem:[#allocation2 + $0x8] sm:$0xf] %vm227, %v225
      %229 = vrot.lane.b32.xlu0 %v144, 94
      %v230 = vpop.permute.xlu0 %229
      %v231 = vrot.slane %v230, 4
      %vm233 = vcmask 503152
      %234 = vst.msk [vmem:[#allocation2 + $0x8] sm:$0xf] %vm233, %v231
      %235 = vrot.lane.b32.xlu0 %v144, 98
      %v236 = vpop.permute.xlu0 %235
      %v237 = vrot.slane %v236, 4
      %vm239 = vcmask 667152
      %240 = vst.msk [vmem:[#allocation2 + $0x8] sm:$0xf] %vm239, %v237
      %241 = vrot.lane.b32.xlu0 %v144, 102
      %v242 = vpop.permute.xlu0 %241
      %v243 = vrot.slane %v242, 4
      %vm245 = vcmask 831152
      %246 = vst.msk [vmem:[#allocation2 + $0x8] sm:$0xf] %vm245, %v243
      %v247 = vld [vmem:[#allocation2] sm:$0xff]
      %v248 = vld [vmem:[#allocation2 + $0x8] sm:$0xff]
      %v249 = vlaneseq
      %v250 = vand.u32 %v249, 127
      %v251 = vadd.s32 %v250, 128
      %v252 = vadd.s32 %v250, 256
      %v253 = vadd.s32 %v250, 384
      %vm254 = vcmp.lt.s32.totalorder %v250, 0
      %v255 = vsub.s32 0, %v250
      %v256 = vsel %vm254, %v255, %v250
      %v257 = vmul.u32.u64.compose %v256, 3435973837
      %v258 = vextract.low.u32 %v257
      %v259 = vextract.high.u32 %v257
      %v260 = vshrl.u32 %v259, 4
      %v261 = vmul.u32 %v260, 20
      %v262 = vsub.s32 %v256, %v261
      %v263 = vsub.s32 0, %v262
      %v264 = vsel %vm254, %v263, %v262
      %vm265 = vcmp.lt.s32.totalorder %v251, 0
      %v266 = vsub.s32 0, %v251
      %v267 = vsel %vm265, %v266, %v251
      %v268 = vmul.u32.u64.compose %v267, 3435973837
      %v269 = vextract.low.u32 %v268
      %v270 = vextract.high.u32 %v268
      %v271 = vshrl.u32 %v270, 4
      %v272 = vmul.u32 %v271, 20
      %v273 = vsub.s32 %v267, %v272
      %v274 = vsub.s32 0, %v273
      %v275 = vsel %vm265, %v274, %v273
      %vm276 = vcmp.lt.s32.totalorder %v252, 0
      %v277 = vsub.s32 0, %v252
      %v278 = vsel %vm276, %v277, %v252
      %v279 = vmul.u32.u64.compose %v278, 3435973837
      %v280 = vextract.low.u32 %v279
      %v281 = vextract.high.u32 %v279
      %v282 = vshrl.u32 %v281, 4
      %v283 = vmul.u32 %v282, 20
      %v284 = vsub.s32 %v278, %v283
      %v285 = vsub.s32 0, %v284
      %v286 = vsel %vm276, %v285, %v284
      %vm287 = vcmp.lt.s32.totalorder %v253, 0
      %v288 = vsub.s32 0, %v253
      %v289 = vsel %vm287, %v288, %v253
      %v290 = vmul.u32.u64.compose %v289, 3435973837
      %v291 = vextract.low.u32 %v290
      %v292 = vextract.high.u32 %v290
      %v293 = vshrl.u32 %v292, 4
      %v294 = vmul.u32 %v293, 20
      %v295 = vsub.s32 %v289, %v294
      %v296 = vsub.s32 0, %v295
      %v297 = vsel %vm287, %v296, %v295
      %vm298 = vcmp.ne.s32.totalorder %v264, 0
      %vm299 = vcmp.ne.s32.totalorder %v275, 0
      %vm300 = vcmp.ne.s32.totalorder %v286, 0
      %vm301 = vcmp.ne.s32.totalorder %v297, 0
      %vm302 = vcmp.lt.s32.totalorder %v264, 0
      %vm303 = vcmp.lt.s32.totalorder %v275, 0
      %vm304 = vcmp.lt.s32.totalorder %v286, 0
      %vm305 = vcmp.lt.s32.totalorder %v297, 0
      %vm306 = vmand %vm302, %vm298
      %vm307 = vmand %vm303, %vm299
      %vm308 = vmand %vm304, %vm300
      %vm309 = vmand %vm305, %vm301
      %v310 = vadd.s32 %v264, 20
      %v311 = vadd.s32 %v275, 20
      %v312 = vadd.s32 %v286, 20
      %v313 = vadd.s32 %v297, 20
      %v314 = vsel %vm306, %v310, %v264
      %v315 = vsel %vm307, %v311, %v275
      %v316 = vsel %vm308, %v312, %v286
      %v317 = vsel %vm309, %v313, %v297
      %vm318 = vcmp.eq.s32.totalorder %v314, 0
      %vm319 = vcmp.eq.s32.totalorder %v315, 0
      %vm320 = vcmp.eq.s32.totalorder %v316, 0
      %vm321 = vcmp.eq.s32.totalorder %v317, 0
      %v324 = vcombine.high %v247, %v247
      %v325 = vcombine.high %v248, %v248
      %326 = vrot.lane.b32.xlu0 %v247, 124
      %v327 = vpop.permute.xlu0 %326
      %328 = vrot.lane.b32.xlu0 %v324, 124
      %v329 = vpop.permute.xlu0 %328
      %330 = vrot.lane.b32.xlu0 %v248, 124
      %v331 = vpop.permute.xlu0 %330
      %332 = vrot.lane.b32.xlu0 %v325, 124
      %v333 = vpop.permute.xlu0 %332
      %vm334 = vcmask 1014784
      %v335 = vsel %vm334, %v327, %v329
      %v336 = vsel %vm334, %v329, %v331
      %v337 = vsel %vm334, %v331, %v333
      %342 = vrot.lane.b32.xlu0 %v247, 12
      %v343 = vpop.permute.xlu0 %342
      %vm345 = vcmask 97280
      %v346 = vsel %vm345, %v333, %v343
      %v349 = vsel %vm318, %v335, %v247
      %v350 = vsel %vm319, %v336, %v324
      %v351 = vsel %vm320, %v337, %v248
      %v352 = vsel %vm321, %v346, %v325
      %vm353 = vcmp.eq.s32.totalorder %v314, 19
      %vm354 = vcmp.eq.s32.totalorder %v315, 19
      %vm355 = vcmp.eq.s32.totalorder %v316, 19
      %vm356 = vcmp.eq.s32.totalorder %v317, 19
      %358 = vrot.lane.b32.xlu0 %v352, 116
      %v359 = vpop.permute.xlu0 %358
      %364 = vrot.lane.b32.xlu0 %v349, 4
      %v365 = vpop.permute.xlu0 %364
      %366 = vrot.lane.b32.xlu0 %v350, 4
      %v367 = vpop.permute.xlu0 %366
      %368 = vrot.lane.b32.xlu0 %v351, 4
      %v369 = vpop.permute.xlu0 %368
      %370 = vrot.lane.b32.xlu0 %v352, 4
      %v371 = vpop.permute.xlu0 %370
      %vm372 = vcmask 31744
      %v373 = vsel %vm372, %v365, %v367
      %v374 = vsel %vm372, %v367, %v369
      %v375 = vsel %vm372, %v369, %v371
      %v380 = vsel %vm372, %v359, %v365
      %v381 = vsel %vm353, %v380, %v349
      %v382 = vsel %vm354, %v373, %v350
      %v383 = vsel %vm355, %v374, %v351
      %v384 = vsel %vm356, %v375, %v352
      %vm385 = vcmp.eq.s32.totalorder %v314, 1
      %vm386 = vcmp.eq.s32.totalorder %v315, 1
      %vm387 = vcmp.eq.s32.totalorder %v316, 1
      %vm388 = vcmp.eq.s32.totalorder %v317, 1
      %393 = vrot.lane.b32.xlu0 %v381, 126
      %v394 = vpop.permute.xlu0 %393
      %395 = vrot.lane.b32.xlu0 %v382, 126
      %v396 = vpop.permute.xlu0 %395
      %397 = vrot.lane.b32.xlu0 %v383, 126
      %v398 = vpop.permute.xlu0 %397
      %399 = vrot.lane.b32.xlu0 %v384, 126
      %v400 = vpop.permute.xlu0 %399
      %vm401 = vcmask 1031168
      %v402 = vsel %vm401, %v394, %v396
      %v403 = vsel %vm401, %v396, %v398
      %v404 = vsel %vm401, %v398, %v400
      %409 = vrot.lane.b32.xlu0 %v381, 14
      %v410 = vpop.permute.xlu0 %409
      %vm412 = vcmask 113664
      %v413 = vsel %vm412, %v400, %v410
      %v414 = vsel %vm385, %v402, %v381
      %v415 = vsel %vm386, %v403, %v382
      %v416 = vsel %vm387, %v404, %v383
      %v417 = vsel %vm388, %v413, %v384
      %vm418 = vcmp.eq.s32.totalorder %v314, 18
      %vm419 = vcmp.eq.s32.totalorder %v315, 18
      %vm420 = vcmp.eq.s32.totalorder %v316, 18
      %vm421 = vcmp.eq.s32.totalorder %v317, 18
      %423 = vrot.lane.b32.xlu0 %v417, 114
      %v424 = vpop.permute.xlu0 %423
      %429 = vrot.lane.b32.xlu0 %v414, 2
      %v430 = vpop.permute.xlu0 %429
      %431 = vrot.lane.b32.xlu0 %v415, 2
      %v432 = vpop.permute.xlu0 %431
      %433 = vrot.lane.b32.xlu0 %v416, 2
      %v434 = vpop.permute.xlu0 %433
      %435 = vrot.lane.b32.xlu0 %v417, 2
      %v436 = vpop.permute.xlu0 %435
      %vm437 = vcmask 15360
      %v438 = vsel %vm437, %v430, %v432
      %v439 = vsel %vm437, %v432, %v434
      %v440 = vsel %vm437, %v434, %v436
      %v445 = vsel %vm437, %v424, %v430
      %v446 = vsel %vm418, %v445, %v414
      %v447 = vsel %vm419, %v438, %v415
      %v448 = vsel %vm420, %v439, %v416
      %v449 = vsel %vm421, %v440, %v417
      %v454 = vcombine.low %v446, %v447
      %v455 = vcombine.low %v448, %v449
      %458 = vst [vmem:[#allocation2] sm:$0xff] %v454
      %vm459 = vcmask 1043456
      %vm460 = vcmask 130052
      %vm461 = vmor %vm460, %vm459
      %462 = vst.msk [vmem:[#allocation2 + $0x8] sm:$0xff] %vm461, %v455
      %463 = vrot.lane.b32.xlu0 %v446, 48
      %v464 = vpop.permute.xlu0 %463
      %vm466 = vcmask 158720
      %467 = vst.msk [vmem:[#allocation2] sm:$0xf] %vm466, %v464
      %468 = vrot.lane.b32.xlu0 %v448, 80
      %v469 = vpop.permute.xlu0 %468
      %v470 = vrot.slane %v469, 4
      %vm471 = vcmask 654336
      %v472 = vsel %vm471, %v470, %v469
      %vm474 = vcmask 1044448
      %vm475 = vmor %vm460, %vm474
      %476 = vst.msk [vmem:[#allocation2 + $0x8] sm:$0xff] %vm475, %v472
      %477 = vrot.lane.b32.xlu0 %v446, 88
      %v478 = vpop.permute.xlu0 %477
      %vm480 = vcmask 322720
      %481 = vst.msk [vmem:[#allocation2] sm:$0xf] %vm480, %v478
      %482 = vrot.lane.b32.xlu0 %v448, 40
      %v483 = vpop.permute.xlu0 %482
      %vm485 = vcmask 1011520
      %486 = vst.msk [vmem:[#allocation2 + $0x8] sm:$0xf] %vm485, %v483
      %vm487 = vcmask 158848
      %488 = vst.msk [vmem:[#allocation2 + $0xc] sm:$0xf] %vm487, 0.0
      %v489 = vld [vmem:[#allocation2] sm:$0xff]
      %v490 = vld [vmem:[#allocation2 + $0x8] sm:$0xf]
      %v493 = vcombine.high %v489, %v489
      %v495 = vcombine.low %v489, %v489
      %v496 = vcombine.low %v490, %v490
      %497 = vrot.lane.b32.xlu0 %v495, 127
      %v498 = vpop.permute.xlu0 %497
      %499 = vrot.lane.b32.xlu0 %v489, 127
      %v500 = vpop.permute.xlu0 %499
      %501 = vrot.lane.b32.xlu0 %v496, 127
      %v502 = vpop.permute.xlu0 %501
      %vm503 = vcmask 1039360
      %v504 = vsel %vm503, %v498, %v500
      %v505 = vsel %vm503, %v500, %v502
      %v509 = vsel %vm459, %v489, %v504
      %v510 = vsel %vm459, %v493, %v505
      %v511 = vsel %vm459, %v490, %v502
      %512 = vst [vmem:[#allocation3] sm:$0xff] %v509
      %513 = vst [vmem:[#allocation3 + $0x8] sm:$0xff] %v510
      %vm514 = vcmask 523264
      %515 = vst.msk [vmem:[#allocation3 + $0x10] sm:$0xff] %vm514, %v511
      %v516 = vld [vmem:[#allocation2] sm:$0xff]
      %v517 = vld [vmem:[#allocation2 + $0x8] sm:$0xf]
      %v520 = vcombine.high %v516, %v516
      %v522 = vcombine.low %v516, %v516
      %v523 = vcombine.low %v517, %v517
      %524 = vrot.lane.b32.xlu0 %v522, 127
      %v525 = vpop.permute.xlu0 %524
      %526 = vrot.lane.b32.xlu0 %v516, 127
      %v527 = vpop.permute.xlu0 %526
      %528 = vrot.lane.b32.xlu0 %v523, 127
      %v529 = vpop.permute.xlu0 %528
      %v530 = vsel %vm503, %v525, %v527
      %v531 = vsel %vm503, %v527, %v529
      %v535 = vsel %vm459, %v516, %v530
      %v536 = vsel %vm459, %v520, %v531
      %v537 = vsel %vm459, %v517, %v529
      %541 = vrot.lane.b32.xlu0 %v535, 126
      %v542 = vpop.permute.xlu0 %541
      %543 = vrot.lane.b32.xlu0 %v536, 126
      %v544 = vpop.permute.xlu0 %543
      %545 = vrot.lane.b32.xlu0 %v537, 126
      %v546 = vpop.permute.xlu0 %545
      %v547 = vsel %vm401, %v542, %v544
      %v548 = vsel %vm401, %v544, %v546
      %552 = vst [vmem:[#allocation3 + $0x18] sm:$0xff] %v547
      %553 = vst [vmem:[#allocation3 + $0x20] sm:$0xff] %v548
      %554 = vst.msk [vmem:[#allocation3 + $0x28] sm:$0xff] %vm514, %v546
      %v555 = vld [vmem:[#allocation2] sm:$0xff]
      %v556 = vld [vmem:[#allocation2 + $0x8] sm:$0xf]
      %v559 = vcombine.high %v555, %v555
      %v561 = vcombine.low %v555, %v555
      %v562 = vcombine.low %v556, %v556
      %563 = vrot.lane.b32.xlu0 %v561, 112
      %v564 = vpop.permute.xlu0 %563
      %565 = vrot.lane.b32.xlu0 %v555, 112
      %v566 = vpop.permute.xlu0 %565
      %567 = vrot.lane.b32.xlu0 %v562, 112
      %v568 = vpop.permute.xlu0 %567
      %vm569 = vcmask 916480
      %v570 = vsel %vm569, %v564, %v566
      %v571 = vsel %vm569, %v566, %v568
      %v575 = vsel %vm459, %v555, %v570
      %v576 = vsel %vm459, %v559, %v571
      %v577 = vsel %vm459, %v556, %v568
      %581 = vrot.lane.b32.xlu0 %v575, 124
      %v582 = vpop.permute.xlu0 %581
      %583 = vrot.lane.b32.xlu0 %v576, 124
      %v584 = vpop.permute.xlu0 %583
      %585 = vrot.lane.b32.xlu0 %v577, 124
      %v586 = vpop.permute.xlu0 %585
      %v587 = vsel %vm334, %v582, %v584
      %v588 = vsel %vm334, %v584, %v586
      %592 = vst [vmem:[#allocation3 + $0x30] sm:$0xff] %v587
      %593 = vst [vmem:[#allocation3 + $0x38] sm:$0xff] %v588
      %594 = vst.msk [vmem:[#allocation3 + $0x40] sm:$0xff] %vm514, %v586
      %v595 = vld [vmem:[#allocation2] sm:$0xff]
      %v596 = vld [vmem:[#allocation2 + $0x8] sm:$0xf]
      %v599 = vcombine.high %v595, %v595
      %v601 = vcombine.low %v595, %v595
      %v602 = vcombine.low %v596, %v596
      %603 = vrot.lane.b32.xlu0 %v601, 127
      %v604 = vpop.permute.xlu0 %603
      %605 = vrot.lane.b32.xlu0 %v595, 127
      %v606 = vpop.permute.xlu0 %605
      %607 = vrot.lane.b32.xlu0 %v602, 127
      %v608 = vpop.permute.xlu0 %607
      %v609 = vsel %vm503, %v604, %v606
      %v610 = vsel %vm503, %v606, %v608
      %v614 = vsel %vm459, %v595, %v609
      %v615 = vsel %vm459, %v599, %v610
      %v616 = vsel %vm459, %v596, %v608
      %620 = vrot.lane.b32.xlu0 %v614, 107
      %v621 = vpop.permute.xlu0 %620
      %622 = vrot.lane.b32.xlu0 %v615, 107
      %v623 = vpop.permute.xlu0 %622
      %624 = vrot.lane.b32.xlu0 %v616, 107
      %v625 = vpop.permute.xlu0 %624
      %vm626 = vcmask 875520
      %v627 = vsel %vm626, %v621, %v623
      %v628 = vsel %vm626, %v623, %v625
      %632 = vst [vmem:[#allocation3 + $0x48] sm:$0xff] %v627
      %633 = vst [vmem:[#allocation3 + $0x50] sm:$0xff] %v628
      %634 = vst.msk [vmem:[#allocation3 + $0x58] sm:$0xff] %vm514, %v625
      %v635 = vld [vmem:[#allocation2] sm:$0xff]
      %v636 = vld [vmem:[#allocation2 + $0x8] sm:$0xf]
      %v639 = vcombine.high %v635, %v635
      %v641 = vcombine.low %v635, %v635
      %v642 = vcombine.low %v636, %v636
      %643 = vrot.lane.b32.xlu0 %v641, 127
      %v644 = vpop.permute.xlu0 %643
      %645 = vrot.lane.b32.xlu0 %v635, 127
      %v646 = vpop.permute.xlu0 %645
      %647 = vrot.lane.b32.xlu0 %v642, 127
      %v648 = vpop.permute.xlu0 %647
      %v649 = vsel %vm503, %v644, %v646
      %v650 = vsel %vm503, %v646, %v648
      %v654 = vsel %vm459, %v635, %v649
      %v655 = vsel %vm459, %v639, %v650
      %v656 = vsel %vm459, %v636, %v648
      %660 = vrot.lane.b32.xlu0 %v654, 105
      %v661 = vpop.permute.xlu0 %660
      %662 = vrot.lane.b32.xlu0 %v655, 105
      %v663 = vpop.permute.xlu0 %662
      %664 = vrot.lane.b32.xlu0 %v656, 105
      %v665 = vpop.permute.xlu0 %664
      %vm666 = vcmask 859136
      %v667 = vsel %vm666, %v661, %v663
      %v668 = vsel %vm666, %v663, %v665
      %672 = vst [vmem:[#allocation3 + $0x60] sm:$0xff] %v667
      %673 = vst [vmem:[#allocation3 + $0x68] sm:$0xff] %v668
      %674 = vst.msk [vmem:[#allocation3 + $0x70] sm:$0xff] %vm514, %v665
      %v675 = vld [vmem:[#allocation2] sm:$0xff]
      %v676 = vld [vmem:[#allocation2 + $0x8] sm:$0xf]
      %v679 = vcombine.high %v675, %v675
      %v681 = vcombine.low %v675, %v675
      %v682 = vcombine.low %v676, %v676
      %683 = vrot.lane.b32.xlu0 %v681, 127
      %v684 = vpop.permute.xlu0 %683
      %685 = vrot.lane.b32.xlu0 %v675, 127
      %v686 = vpop.permute.xlu0 %685
      %687 = vrot.lane.b32.xlu0 %v682, 127
      %v688 = vpop.permute.xlu0 %687
      %v689 = vsel %vm503, %v684, %v686
      %v690 = vsel %vm503, %v686, %v688
      %v694 = vsel %vm459, %v675, %v689
      %v695 = vsel %vm459, %v679, %v690
      %v696 = vsel %vm459, %v676, %v688
      %700 = vrot.lane.b32.xlu0 %v694, 88
      %v701 = vpop.permute.xlu0 %700
      %702 = vrot.lane.b32.xlu0 %v695, 88
      %v703 = vpop.permute.xlu0 %702
      %704 = vrot.lane.b32.xlu0 %v696, 88
      %v705 = vpop.permute.xlu0 %704
      %vm706 = vcmask 719872
      %v707 = vsel %vm706, %v701, %v703
      %v708 = vsel %vm706, %v703, %v705
      %712 = vst [vmem:[#allocation3 + $0x78] sm:$0xff] %v707
      %713 = vst [vmem:[#allocation3 + $0x80] sm:$0xff] %v708
      %714 = vst.msk [vmem:[#allocation3 + $0x88] sm:$0xff] %vm514, %v705
      %v715 = vld [vmem:[#allocation2] sm:$0xff]
      %v716 = vld [vmem:[#allocation2 + $0x8] sm:$0xf]
      %v719 = vcombine.high %v715, %v715
      %v721 = vcombine.low %v715, %v715
      %v722 = vcombine.low %v716, %v716
      %723 = vrot.lane.b32.xlu0 %v721, 127
      %v724 = vpop.permute.xlu0 %723
      %725 = vrot.lane.b32.xlu0 %v715, 127
      %v726 = vpop.permute.xlu0 %725
      %727 = vrot.lane.b32.xlu0 %v722, 127
      %v728 = vpop.permute.xlu0 %727
      %v729 = vsel %vm503, %v724, %v726
      %v730 = vsel %vm503, %v726, %v728
      %v734 = vsel %vm459, %v715, %v729
      %v735 = vsel %vm459, %v719, %v730
      %v736 = vsel %vm459, %v716, %v728
      %740 = vrot.lane.b32.xlu0 %v734, 86
      %v741 = vpop.permute.xlu0 %740
      %742 = vrot.lane.b32.xlu0 %v735, 86
      %v743 = vpop.permute.xlu0 %742
      %744 = vrot.lane.b32.xlu0 %v736, 86
      %v745 = vpop.permute.xlu0 %744
      %vm746 = vcmask 703488
      %v747 = vsel %vm746, %v741, %v743
      %v748 = vsel %vm746, %v743, %v745
      %752 = vst [vmem:[#allocation3 + $0x90] sm:$0xff] %v747
      %753 = vst [vmem:[#allocation3 + $0x98] sm:$0xff] %v748
      %754 = vst.msk [vmem:[#allocation3 + $0xa0] sm:$0xff] %vm514, %v745
      %v755 = vld [vmem:[#allocation2] sm:$0xff]
      %v756 = vld [vmem:[#allocation2 + $0x8] sm:$0xf]
      %v759 = vcombine.high %v755, %v755
      %v761 = vcombine.low %v755, %v755
      %v762 = vcombine.low %v756, %v756
      %763 = vrot.lane.b32.xlu0 %v761, 112
      %v764 = vpop.permute.xlu0 %763
      %765 = vrot.lane.b32.xlu0 %v755, 112
      %v766 = vpop.permute.xlu0 %765
      %767 = vrot.lane.b32.xlu0 %v762, 112
      %v768 = vpop.permute.xlu0 %767
      %v769 = vsel %vm569, %v764, %v766
      %v770 = vsel %vm569, %v766, %v768
      %v774 = vsel %vm459, %v755, %v769
      %v775 = vsel %vm459, %v759, %v770
      %v776 = vsel %vm459, %v756, %v768
      %780 = vrot.lane.b32.xlu0 %v774, 84
      %v781 = vpop.permute.xlu0 %780
      %782 = vrot.lane.b32.xlu0 %v775, 84
      %v783 = vpop.permute.xlu0 %782
      %784 = vrot.lane.b32.xlu0 %v776, 84
      %v785 = vpop.permute.xlu0 %784
      %vm786 = vcmask 687104
      %v787 = vsel %vm786, %v781, %v783
      %v788 = vsel %vm786, %v783, %v785
      %792 = vst [vmem:[#allocation3 + $0xa8] sm:$0xff] %v787
      %793 = vst [vmem:[#allocation3 + $0xb0] sm:$0xff] %v788
      %794 = vst.msk [vmem:[#allocation3 + $0xb8] sm:$0xff] %vm514, %v785
      %v795 = vld [vmem:[#allocation2] sm:$0xff]
      %v796 = vld [vmem:[#allocation2 + $0x8] sm:$0xf]
      %v799 = vcombine.high %v795, %v795
      %v801 = vcombine.low %v795, %v795
      %v802 = vcombine.low %v796, %v796
      %803 = vrot.lane.b32.xlu0 %v801, 127
      %v804 = vpop.permute.xlu0 %803
      %805 = vrot.lane.b32.xlu0 %v795, 127
      %v806 = vpop.permute.xlu0 %805
      %807 = vrot.lane.b32.xlu0 %v802, 127
      %v808 = vpop.permute.xlu0 %807
      %v809 = vsel %vm503, %v804, %v806
      %v810 = vsel %vm503, %v806, %v808
      %v814 = vsel %vm459, %v795, %v809
      %v815 = vsel %vm459, %v799, %v810
      %v816 = vsel %vm459, %v796, %v808
      %820 = vrot.lane.b32.xlu0 %v814, 67
      %v821 = vpop.permute.xlu0 %820
      %822 = vrot.lane.b32.xlu0 %v815, 67
      %v823 = vpop.permute.xlu0 %822
      %824 = vrot.lane.b32.xlu0 %v816, 67
      %v825 = vpop.permute.xlu0 %824
      %vm826 = vcmask 547840
      %v827 = vsel %vm826, %v821, %v823
      %v828 = vsel %vm826, %v823, %v825
      %832 = vst [vmem:[#allocation3 + $0xc0] sm:$0xff] %v827
      %833 = vst [vmem:[#allocation3 + $0xc8] sm:$0xff] %v828
      %834 = vst.msk [vmem:[#allocation3 + $0xd0] sm:$0xff] %vm514, %v825
      %v835 = vld [vmem:[#allocation2] sm:$0xff]
      %v836 = vld [vmem:[#allocation2 + $0x8] sm:$0xf]
      %v839 = vcombine.high %v835, %v835
      %v841 = vcombine.low %v835, %v835
      %v842 = vcombine.low %v836, %v836
      %843 = vrot.lane.b32.xlu0 %v841, 127
      %v844 = vpop.permute.xlu0 %843
      %845 = vrot.lane.b32.xlu0 %v835, 127
      %v846 = vpop.permute.xlu0 %845
      %847 = vrot.lane.b32.xlu0 %v842, 127
      %v848 = vpop.permute.xlu0 %847
      %v849 = vsel %vm503, %v844, %v846
      %v850 = vsel %vm503, %v846, %v848
      %v854 = vsel %vm459, %v835, %v849
      %v855 = vsel %vm459, %v839, %v850
      %v856 = vsel %vm459, %v836, %v848
      %860 = vrot.lane.b32.xlu0 %v854, 65
      %v861 = vpop.permute.xlu0 %860
      %862 = vrot.lane.b32.xlu0 %v855, 65
      %v863 = vpop.permute.xlu0 %862
      %864 = vrot.lane.b32.xlu0 %v856, 65
      %v865 = vpop.permute.xlu0 %864
      %vm866 = vcmask 531456
      %v867 = vsel %vm866, %v861, %v863
      %v868 = vsel %vm866, %v863, %v865
      %872 = vst [vmem:[#allocation3 + $0xd8] sm:$0xff] %v867
      %873 = vst [vmem:[#allocation3 + $0xe0] sm:$0xff] %v868
      %874 = vst.msk [vmem:[#allocation3 + $0xe8] sm:$0xff] %vm514, %v865
      %v875 = vld [vmem:[#allocation2] sm:$0xff]
      %v876 = vld [vmem:[#allocation2 + $0x8] sm:$0xff]
      %v879 = vcombine.high %v875, %v875
      %v880 = vcombine.high %v876, %v876
      %v883 = vcombine.low %v875, %v875
      %v884 = vcombine.low %v876, %v876
      %885 = vrot.lane.b32.xlu0 %v883, 127
      %v886 = vpop.permute.xlu0 %885
      %887 = vrot.lane.b32.xlu0 %v875, 127
      %v888 = vpop.permute.xlu0 %887
      %889 = vrot.lane.b32.xlu0 %v884, 127
      %v890 = vpop.permute.xlu0 %889
      %891 = vrot.lane.b32.xlu0 %v876, 127
      %v892 = vpop.permute.xlu0 %891
      %v893 = vsel %vm503, %v886, %v888
      %v894 = vsel %vm503, %v888, %v890
      %v895 = vsel %vm503, %v890, %v892
      %v900 = vsel %vm459, %v875, %v893
      %v901 = vsel %vm459, %v879, %v894
      %v902 = vsel %vm459, %v876, %v895
      %v903 = vsel %vm459, %v880, %v892
      %908 = vrot.lane.b32.xlu0 %v900, 48
      %v909 = vpop.permute.xlu0 %908
      %910 = vrot.lane.b32.xlu0 %v901, 48
      %v911 = vpop.permute.xlu0 %910
      %912 = vrot.lane.b32.xlu0 %v902, 48
      %v913 = vpop.permute.xlu0 %912
      %914 = vrot.lane.b32.xlu0 %v903, 48
      %v915 = vpop.permute.xlu0 %914
      %vm916 = vcmask 392192
      %v917 = vsel %vm916, %v909, %v911
      %v918 = vsel %vm916, %v911, %v913
      %v919 = vsel %vm916, %v913, %v915
      %923 = vst [vmem:[#allocation3 + $0xf0] sm:$0xff] %v917
      %924 = vst [vmem:[#allocation3 + $0xf8] sm:$0xff] %v918
      %925 = vst.msk [vmem:[#allocation3 + $0x100] sm:$0xff] %vm514, %v919
      %v926 = vld [vmem:[#allocation2] sm:$0xff]
      %v927 = vld [vmem:[#allocation2 + $0x8] sm:$0xff]
      %v930 = vcombine.high %v926, %v926
      %v931 = vcombine.high %v927, %v927
      %v934 = vcombine.low %v926, %v926
      %v935 = vcombine.low %v927, %v927
      %936 = vrot.lane.b32.xlu0 %v934, 127
      %v937 = vpop.permute.xlu0 %936
      %938 = vrot.lane.b32.xlu0 %v926, 127
      %v939 = vpop.permute.xlu0 %938
      %940 = vrot.lane.b32.xlu0 %v935, 127
      %v941 = vpop.permute.xlu0 %940
      %942 = vrot.lane.b32.xlu0 %v927, 127
      %v943 = vpop.permute.xlu0 %942
      %v944 = vsel %vm503, %v937, %v939
      %v945 = vsel %vm503, %v939, %v941
      %v946 = vsel %vm503, %v941, %v943
      %v951 = vsel %vm459, %v926, %v944
      %v952 = vsel %vm459, %v930, %v945
      %v953 = vsel %vm459, %v927, %v946
      %v954 = vsel %vm459, %v931, %v943
      %959 = vrot.lane.b32.xlu0 %v951, 46
      %v960 = vpop.permute.xlu0 %959
      %961 = vrot.lane.b32.xlu0 %v952, 46
      %v962 = vpop.permute.xlu0 %961
      %963 = vrot.lane.b32.xlu0 %v953, 46
      %v964 = vpop.permute.xlu0 %963
      %965 = vrot.lane.b32.xlu0 %v954, 46
      %v966 = vpop.permute.xlu0 %965
      %vm967 = vcmask 375808
      %v968 = vsel %vm967, %v960, %v962
      %v969 = vsel %vm967, %v962, %v964
      %v970 = vsel %vm967, %v964, %v966
      %974 = vst [vmem:[#allocation3 + $0x108] sm:$0xff] %v968
      %975 = vst [vmem:[#allocation3 + $0x110] sm:$0xff] %v969
      %976 = vst.msk [vmem:[#allocation3 + $0x118] sm:$0xff] %vm514, %v970
      %v977 = vld [vmem:[#allocation2] sm:$0xff]
      %v978 = vld [vmem:[#allocation2 + $0x8] sm:$0xff]
      %v981 = vcombine.high %v977, %v977
      %v982 = vcombine.high %v978, %v978
      %983 = vrot.lane.b32.xlu0 %v977, 44
      %v984 = vpop.permute.xlu0 %983
      %985 = vrot.lane.b32.xlu0 %v981, 44
      %v986 = vpop.permute.xlu0 %985
      %987 = vrot.lane.b32.xlu0 %v978, 44
      %v988 = vpop.permute.xlu0 %987
      %989 = vrot.lane.b32.xlu0 %v982, 44
      %v990 = vpop.permute.xlu0 %989
      %vm991 = vcmask 359424
      %v992 = vsel %vm991, %v984, %v986
      %v993 = vsel %vm991, %v986, %v988
      %v994 = vsel %vm991, %v988, %v990
      %998 = vst [vmem:[#allocation3 + $0x120] sm:$0xf] %v992
      %999 = vst [vmem:[#allocation3 + $0x128] sm:$0xf] %v993
      %vm1000 = vcmask 519168
      %1001 = vst.msk [vmem:[#allocation3 + $0x130] sm:$0xf] %vm1000, %v994
      %1002 = vst [vmem:[#allocation3 + $0x120] sm:$0xf0] 0.0
      %1003 = vst [vmem:[#allocation3 + $0x128] sm:$0xf0] 0.0
      %vm1004 = vcmask 523268
      %1005 = vst.msk [vmem:[#allocation3 + $0x130] sm:$0xf0] %vm1004, 0.0
      %1006 = vst [vmem:[#allocation3 + $0x138] sm:$0xff] 0.0
      %1007 = vst [vmem:[#allocation3 + $0x140] sm:$0xff] 0.0
      %1008 = vst.msk [vmem:[#allocation3 + $0x148] sm:$0xff] %vm514, 0.0
      %1009 = vst [vmem:[#allocation3 + $0x150] sm:$0xff] 0.0
      %1010 = vst [vmem:[#allocation3 + $0x158] sm:$0xff] 0.0
      %1011 = vst.msk [vmem:[#allocation3 + $0x160] sm:$0xff] %vm514, 0.0
      %1012 = vst [vmem:[#allocation3 + $0x168] sm:$0xff] 0.0
      %1013 = vst [vmem:[#allocation3 + $0x170] sm:$0xff] 0.0
      %1014 = vst.msk [vmem:[#allocation3 + $0x178] sm:$0xff] %vm514, 0.0
      %v1015 = vld [vmem:[%s1] sm:$0xf]
      %v1016 = vld [vmem:[#allocation3] sm:$0xff]
      %v1017 = vld [vmem:[#allocation3 + $0x8] sm:$0xff]
      %v1018 = vld [vmem:[#allocation3 + $0x10] sm:$0xff]
      %v1019 = vld [vmem:[#allocation3 + $0x18] sm:$0xff]
      %v1020 = vld [vmem:[#allocation3 + $0x20] sm:$0xff]
      %v1021 = vld [vmem:[#allocation3 + $0x28] sm:$0xff]
      %v1022 = vld [vmem:[#allocation3 + $0x30] sm:$0xff]
      %v1023 = vld [vmem:[#allocation3 + $0x38] sm:$0xff]
      %v1024 = vld [vmem:[#allocation3 + $0x40] sm:$0xff]
      %v1025 = vld [vmem:[#allocation3 + $0x48] sm:$0xff]
      %v1026 = vld [vmem:[#allocation3 + $0x50] sm:$0xff]
      %v1027 = vld [vmem:[#allocation3 + $0x58] sm:$0xff]
      %v1028 = vld [vmem:[#allocation3 + $0x60] sm:$0xff]
      %v1029 = vld [vmem:[#allocation3 + $0x68] sm:$0xff]
      %v1030 = vld [vmem:[#allocation3 + $0x70] sm:$0xff]
      %v1031 = vld [vmem:[#allocation3 + $0x78] sm:$0xff]
      %v1032 = vld [vmem:[#allocation3 + $0x80] sm:$0xff]
      %v1033 = vld [vmem:[#allocation3 + $0x88] sm:$0xff]
      %v1034 = vld [vmem:[#allocation3 + $0x90] sm:$0xff]
      %v1035 = vld [vmem:[#allocation3 + $0x98] sm:$0xff]
      %v1036 = vld [vmem:[#allocation3 + $0xa0] sm:$0xff]
      %v1037 = vld [vmem:[#allocation3 + $0xa8] sm:$0xff]
      %v1038 = vld [vmem:[#allocation3 + $0xb0] sm:$0xff]
      %v1039 = vld [vmem:[#allocation3 + $0xb8] sm:$0xff]
      %v1040 = vld [vmem:[#allocation3 + $0xc0] sm:$0xff]
      %v1041 = vld [vmem:[#allocation3 + $0xc8] sm:$0xff]
      %v1042 = vld [vmem:[#allocation3 + $0xd0] sm:$0xff]
      %v1043 = vld [vmem:[#allocation3 + $0xd8] sm:$0xff]
      %v1044 = vld [vmem:[#allocation3 + $0xe0] sm:$0xff]
      %v1045 = vld [vmem:[#allocation3 + $0xe8] sm:$0xff]
      %v1046 = vld [vmem:[#allocation3 + $0xf0] sm:$0xff]
      %v1047 = vld [vmem:[#allocation3 + $0xf8] sm:$0xff]
      %v1048 = vld [vmem:[#allocation3 + $0x100] sm:$0xff]
      %v1049 = vld [vmem:[#allocation3 + $0x108] sm:$0xff]
      %v1050 = vld [vmem:[#allocation3 + $0x110] sm:$0xff]
      %v1051 = vld [vmem:[#allocation3 + $0x118] sm:$0xff]
      %v1052 = vld [vmem:[#allocation3 + $0x120] sm:$0xff]
      %v1053 = vld [vmem:[#allocation3 + $0x128] sm:$0xff]
      %v1054 = vld [vmem:[#allocation3 + $0x130] sm:$0xff]
      %v1055 = vld [vmem:[#allocation3 + $0x138] sm:$0xff]
      %v1056 = vld [vmem:[#allocation3 + $0x140] sm:$0xff]
      %v1057 = vld [vmem:[#allocation3 + $0x148] sm:$0xff]
      %v1058 = vld [vmem:[#allocation3 + $0x150] sm:$0xff]
      %v1059 = vld [vmem:[#allocation3 + $0x158] sm:$0xff]
      %v1060 = vld [vmem:[#allocation3 + $0x160] sm:$0xff]
      %v1061 = vld [vmem:[#allocation3 + $0x168] sm:$0xff]
      %v1062 = vld [vmem:[#allocation3 + $0x170] sm:$0xff]
      %v1063 = vld [vmem:[#allocation3 + $0x178] sm:$0xff]
      %1064 = vmatprep.subr.mxu0 %v1017
      %1065 = vmatpush1.msra.mxu0 %v1016
      %1066 = vmatprep.subr.mxu0 %v1020
      %1067 = vmatpush1.msra.mxu0 %v1019
      %1068 = vmatprep.subr.mxu0 %v1023
      %1069 = vmatpush1.msra.mxu0 %v1022
      %1070 = vmatprep.subr.mxu0 %v1026
      %1071 = vmatpush1.msra.mxu0 %v1025
      %1072 = vmatprep.subr.mxu0 %v1029
      %1073 = vmatpush1.msra.mxu0 %v1028
      %1074 = vmatprep.subr.mxu0 %v1032
      %1075 = vmatpush1.msra.mxu0 %v1031
      %1076 = vmatprep.subr.mxu0 %v1035
      %1077 = vmatpush1.msra.mxu0 %v1034
      %1078 = vmatprep.subr.mxu0 %v1038
      %1079 = vmatpush1.msra.mxu0 %v1037
      %1080 = vmatprep.subr.mxu0 %v1041
      %1081 = vmatpush1.msra.mxu0 %v1040
      %1082 = vmatprep.subr.mxu0 %v1044
      %1083 = vmatpush1.msra.mxu0 %v1043
      %1084 = vmatprep.subr.mxu0 %v1047
      %1085 = vmatpush1.msra.mxu0 %v1046
      %1086 = vmatprep.subr.mxu0 %v1050
      %1087 = vmatpush1.msra.mxu0 %v1049
      %1088 = vmatprep.subr.mxu0 %v1053
      %1089 = vmatpush1.msra.mxu0 %v1052
      %1090 = vmatprep.subr.mxu0 %v1056
      %1091 = vmatpush1.msra.mxu0 %v1055
      %1092 = vmatprep.subr.mxu0 %v1059
      %1093 = vmatpush1.msra.mxu0 %v1058
      %1094 = vmatprep.subr.mxu0 %v1062
      %1095 = vmatpush1.msra.mxu0 %v1061
      %1096 = vmatprep.subr.mxu0 0.0
      %1097 = vmatpush1.msra.mxu0 0.0
      %1098 = vmatprep.subr.mxu0 0.0
      %1099 = vmatpush1.msra.mxu0 0.0
      %1100 = vmatprep.subr.mxu0 0.0
      %1101 = vmatpush1.msra.mxu0 0.0
      %1102 = vmatprep.subr.mxu0 0.0
      %1103 = vmatpush1.msra.mxu0 0.0
      %1104 = vmatprep.subr.mxu0 0.0
      %1105 = vmatpush1.msra.mxu0 0.0
      %1106 = vmatprep.subr.mxu0 0.0
      %1107 = vmatpush1.msra.mxu0 0.0
      %1108 = vmatprep.subr.mxu0 0.0
      %1109 = vmatpush1.msra.mxu0 0.0
      %1110 = vmatprep.subr.mxu0 0.0
      %1111 = vmatpush1.msra.mxu0 0.0
      %1112 = vmatprep.subr.mxu0 0.0
      %1113 = vmatpush1.msra.mxu0 0.0
      %1114 = vmatprep.subr.mxu0 0.0
      %1115 = vmatpush1.msra.mxu0 0.0
      %1116 = vmatprep.subr.mxu0 0.0
      %1117 = vmatpush1.msra.mxu0 0.0
      %1118 = vmatprep.subr.mxu0 0.0
      %1119 = vmatpush1.msra.mxu0 0.0
      %1120 = vmatprep.subr.mxu0 0.0
      %1121 = vmatpush1.msra.mxu0 0.0
      %1122 = vmatprep.subr.mxu0 0.0
      %1123 = vmatpush1.msra.mxu0 0.0
      %1124 = vmatprep.subr.mxu0 0.0
      %1125 = vmatpush1.msra.mxu0 0.0
      %1126 = vmatprep.subr.mxu0 0.0
      %1127 = vmatpush1.msra.mxu0 0.0
      %1128 = vmatprep.mubr.f32.mxu0 0.0
      %1129 = vmatmul.mubr.f32.gmra.mrb[0].mxu0 %v1015
      %v1130 = vpop.f32.mrb[0].mxu0
      %v1131 = vadd.f32 0.0, %v1130
      %v1132 = vpop.f32.mrb[0].mxu0
      %v1133 = vadd.f32 0.0, %v1132
      %1134 = vdwg.mxu0
      %1135 = vmatprep.subr.mxu0 0.0
      %1136 = vmatpush1.msra.mxu0 %v1018
      %1137 = vmatprep.subr.mxu0 0.0
      %1138 = vmatpush1.msra.mxu0 %v1021
      %1139 = vmatprep.subr.mxu0 0.0
      %1140 = vmatpush1.msra.mxu0 %v1024
      %1141 = vmatprep.subr.mxu0 0.0
      %1142 = vmatpush1.msra.mxu0 %v1027
      %1143 = vmatprep.subr.mxu0 0.0
      %1144 = vmatpush1.msra.mxu0 %v1030
      %1145 = vmatprep.subr.mxu0 0.0
      %1146 = vmatpush1.msra.mxu0 %v1033
      %1147 = vmatprep.subr.mxu0 0.0
      %1148 = vmatpush1.msra.mxu0 %v1036
      %1149 = vmatprep.subr.mxu0 0.0
      %1150 = vmatpush1.msra.mxu0 %v1039
      %1151 = vmatprep.subr.mxu0 0.0
      %1152 = vmatpush1.msra.mxu0 %v1042
      %1153 = vmatprep.subr.mxu0 0.0
      %1154 = vmatpush1.msra.mxu0 %v1045
      %1155 = vmatprep.subr.mxu0 0.0
      %1156 = vmatpush1.msra.mxu0 %v1048
      %1157 = vmatprep.subr.mxu0 0.0
      %1158 = vmatpush1.msra.mxu0 %v1051
      %1159 = vmatprep.subr.mxu0 0.0
      %1160 = vmatpush1.msra.mxu0 %v1054
      %1161 = vmatprep.subr.mxu0 0.0
      %1162 = vmatpush1.msra.mxu0 %v1057
      %1163 = vmatprep.subr.mxu0 0.0
      %1164 = vmatpush1.msra.mxu0 %v1060
      %1165 = vmatprep.subr.mxu0 0.0
      %1166 = vmatpush1.msra.mxu0 %v1063
      %1167 = vmatprep.subr.mxu0 0.0
      %1168 = vmatpush1.msra.mxu0 0.0
      %1169 = vmatprep.subr.mxu0 0.0
      %1170 = vmatpush1.msra.mxu0 0.0
      %1171 = vmatprep.subr.mxu0 0.0
      %1172 = vmatpush1.msra.mxu0 0.0
      %1173 = vmatprep.subr.mxu0 0.0
      %1174 = vmatpush1.msra.mxu0 0.0
      %1175 = vmatprep.subr.mxu0 0.0
      %1176 = vmatpush1.msra.mxu0 0.0
      %1177 = vmatprep.subr.mxu0 0.0
      %1178 = vmatpush1.msra.mxu0 0.0
      %1179 = vmatprep.subr.mxu0 0.0
      %1180 = vmatpush1.msra.mxu0 0.0
      %1181 = vmatprep.subr.mxu0 0.0
      %1182 = vmatpush1.msra.mxu0 0.0
      %1183 = vmatprep.subr.mxu0 0.0
      %1184 = vmatpush1.msra.mxu0 0.0
      %1185 = vmatprep.subr.mxu0 0.0
      %1186 = vmatpush1.msra.mxu0 0.0
      %1187 = vmatprep.subr.mxu0 0.0
      %1188 = vmatpush1.msra.mxu0 0.0
      %1189 = vmatprep.subr.mxu0 0.0
      %1190 = vmatpush1.msra.mxu0 0.0
      %1191 = vmatprep.subr.mxu0 0.0
      %1192 = vmatpush1.msra.mxu0 0.0
      %1193 = vmatprep.subr.mxu0 0.0
      %1194 = vmatpush1.msra.mxu0 0.0
      %1195 = vmatprep.subr.mxu0 0.0
      %1196 = vmatpush1.msra.mxu0 0.0
      %1197 = vmatprep.subr.mxu0 0.0
      %1198 = vmatpush1.msra.mxu0 0.0
      %1199 = vmatprep.mubr.f32.mxu0 0.0
      %1200 = vmatmul.mubr.f32.gmra.mrb[0].mxu0 %v1015
      %v1201 = vpop.f32.mrb[0].mxu0
      %v1202 = vadd.f32 0.0, %v1201
      %v1203 = vpop.f32.mrb[0].mxu0
      %1204 = vdwg.mxu0
      %vm1205 = vcmp.lt.s32.totalorder %v314, 16
      %vm1206 = vcmp.lt.s32.totalorder %v315, 16
      %vm1207 = vcmp.lt.s32.totalorder %v316, 16
      %v1208 = vsel %vm1205, 1, 0
      %v1209 = vsel %vm1206, 1, 0
      %v1210 = vsel %vm1207, 1, 0
      %v1211 = vcvt.s32.f32 %v1208
      %v1212 = vcvt.s32.f32 %v1209
      %v1213 = vcvt.s32.f32 %v1210
      %v1214 = vmul.f32 %v1131, %v1211
      %v1215 = vmul.f32 %v1133, %v1212
      %v1216 = vmul.f32 %v1202, %v1213
      %v1217 = vsel %vm459, %v1214, 0.0
      %v1218 = vsel %vm459, %v1215, 0.0
      %v1219 = vadd.f32 %v1217, %v1218
      %v1220 = vsel %vm1000, %v1216, 0.0
      %v1221 = vadd.f32 %v1219, %v1220
      %1222 = vadd.xlane.f32.xlu0 %v1221
      %v1223 = vpop.xlane.xlu0 %1222
      %v1224 = vmul.f32 %v1223, 0.00390625
      %v1225 = vmul.f32 %v1214, %v1131
      %v1226 = vmul.f32 %v1215, %v1133
      %v1227 = vmul.f32 %v1216, %v1202
      %v1228 = vsel %vm459, %v1225, 0.0
      %v1229 = vsel %vm459, %v1226, 0.0
      %v1230 = vadd.f32 %v1228, %v1229
      %v1231 = vsel %vm1000, %v1227, 0.0
      %v1232 = vadd.f32 %v1230, %v1231
      %1233 = vadd.xlane.f32.xlu0 %v1232
      %v1234 = vpop.xlane.xlu0 %1233
      %v1235 = vmul.f32 %v1234, 0.00390625
      %v1236 = vmul.f32 %v1224, %v1224
      %v1237 = vsub.f32 %v1235, %v1236
      %v1238 = vsub.f32 %v1131, %v1224
      %v1239 = vsub.f32 %v1133, %v1224
      %v1240 = vsub.f32 %v1202, %v1224
      %v1241 = vadd.f32 %v1237, 1e-05
      %v1242 = vrsqrt.pop %v1241
      %v1243 = vmul.f32 %v1238, %v1242
      %v1244 = vmul.f32 %v1239, %v1242
      %v1245 = vmul.f32 %v1240, %v1242
      %vm1246 = vcmask 125952
      %1247 = vst.msk [vmem:[%s143] sm:$0xf] %vm1246, %v1243
      %1249 = vrot.lane.b32.xlu0 %v1243, 124
      %v1250 = vpop.permute.xlu0 %1249
      %vm1252 = vcmask 257152
      %1253 = vst.msk [vmem:[%s143] sm:$0xf] %vm1252, %v1250
      %1254 = vrot.lane.b32.xlu0 %v1243, 120
      %v1255 = vpop.permute.xlu0 %1254
      %vm1257 = vcmask 388352
      %1258 = vst.msk [vmem:[%s143] sm:$0xf] %vm1257, %v1255
      %1259 = vrot.lane.b32.xlu0 %v1243, 116
      %v1260 = vpop.permute.xlu0 %1259
      %vm1262 = vcmask 519552
      %1263 = vst.msk [vmem:[%s143] sm:$0xf] %vm1262, %v1260
      %1264 = vrot.lane.b32.xlu0 %v1243, 112
      %v1265 = vpop.permute.xlu0 %1264
      %vm1267 = vcmask 650752
      %1268 = vst.msk [vmem:[%s143] sm:$0xf] %vm1267, %v1265
      %1269 = vrot.lane.b32.xlu0 %v1243, 108
      %v1270 = vpop.permute.xlu0 %1269
      %vm1272 = vcmask 781952
      %1273 = vst.msk [vmem:[%s143] sm:$0xf] %vm1272, %v1270
      %v1275 = vcombine.low %v1243, %v1244
      %1276 = vrot.lane.b32.xlu0 %v1275, 104
      %v1277 = vpop.permute.xlu0 %1276
      %v1278 = vrot.slane %v1277, 4
      %vm1279 = vcmask 850944
      %v1280 = vsel %vm1279, %v1277, %v1278
      %vm1282 = vcmask 913152
      %1283 = vst.msk [vmem:[%s143] sm:$0xf] %vm1282, %v1280
      %1284 = vrot.lane.b32.xlu0 %v1244, 100
      %v1285 = vpop.permute.xlu0 %1284
      %vm1287 = vcmask 1044352
      %1288 = vst.msk [vmem:[%s143] sm:$0xf] %vm1287, %v1285
      %1289 = vrot.lane.b32.xlu0 %v1244, 96
      %v1290 = vpop.permute.xlu0 %1289
      %1292 = vst.msk [vmem:[%s143 + $0x4] sm:$0xf] %vm1246, %v1290
      %1293 = vrot.lane.b32.xlu0 %v1244, 92
      %v1294 = vpop.permute.xlu0 %1293
      %1296 = vst.msk [vmem:[%s143 + $0x4] sm:$0xf] %vm1252, %v1294
      %1297 = vrot.lane.b32.xlu0 %v1244, 88
      %v1298 = vpop.permute.xlu0 %1297
      %1300 = vst.msk [vmem:[%s143 + $0x4] sm:$0xf] %vm1257, %v1298
      %1301 = vrot.lane.b32.xlu0 %v1244, 84
      %v1302 = vpop.permute.xlu0 %1301
      %1304 = vst.msk [vmem:[%s143 + $0x4] sm:$0xf] %vm1262, %v1302
      %1305 = vrot.lane.b32.xlu0 %v1244, 80
      %v1306 = vpop.permute.xlu0 %1305
      %1308 = vst.msk [vmem:[%s143 + $0x4] sm:$0xf] %vm1267, %v1306
      %1310 = vrot.lane.b32.xlu0 %v1245, 76
      %v1311 = vpop.permute.xlu0 %1310
      %1313 = vst.msk [vmem:[%s143 + $0x4] sm:$0xf] %vm1272, %v1311
      %1314 = vrot.lane.b32.xlu0 %v1245, 72
      %v1315 = vpop.permute.xlu0 %1314
      %1317 = vst.msk [vmem:[%s143 + $0x4] sm:$0xf] %vm1282, %v1315
      %1318 = vrot.lane.b32.xlu0 %v1245, 68
      %v1319 = vpop.permute.xlu0 %1318
      %1321 = vst.msk [vmem:[%s143 + $0x4] sm:$0xf] %vm1287, %v1319
      %p1322 = scmp.lt.s32.totalorder %s13, 1
      %s1323 = scalar_select %p1322, %s13, 1
      %s1324 = smul.addr %s1323, 2
      %s1325 = smul.addr %s1324, 4
      %s1326 = scalar_lea.vmem %s2, %s1325
      // Predicated region
      $region29: #{resnet_block_forward.1} parent=27 // pred_check
        %p1327 = pneg %p78
      $region30: #{resnet_block_forward.1} parent=27 // pred_check_branch
        %1329 = sbr.rel (%p1327) target = $region32
      $region31: #{resnet_block_forward.1} parent=27 // pred_region
        _
      $region32: #{resnet_block_forward.1} parent=27 // pred_fallthru
        _
    $region28: #{resnet_block_forward.1} parent=5 // pred_fallthru
      _
    %p1330 = scmp.le.s32.totalorder 2, %s8
    // Predicated region
    $region33: #{resnet_block_forward.1} parent=5 // pred_check
      %p1331 = pneg %p1330
    $region34: #{resnet_block_forward.1} parent=5 // pred_check_branch
      %1333 = sbr.rel (%p1331) target = $region36
    $region35: #{resnet_block_forward.1} parent=5 // pred_region
      %s1334 = ssub.s32 %s8, 2
      // Predicated region
      $region37: #{resnet_block_forward.1} parent=35 // pred_check
        %p1335 = pneg %p84
      $region38: #{resnet_block_forward.1} parent=35 // pred_check_branch
        %1337 = sbr.rel (%p1335) target = $region40
      $region39: #{resnet_block_forward.1} parent=35 // pred_region
        %p1338 = scmp.lt.s32.totalorder %s14, 1
        %s1339 = scalar_select %p1338, %s14, 1
        %s1340 = smul.addr %s1339, 2
        %s1341 = smul.addr %s1340, 4
        %s1342 = scalar_lea.vmem %s2, %s1341
      $region40: #{resnet_block_forward.1} parent=35 // pred_fallthru
        _
    $region36: #{resnet_block_forward.1} parent=5 // pred_fallthru
      _
  $region6: #{resnet_block_forward.1} parent=0 // loop_footer
    %s12 = sadd.s32 1, %s8
  $region7: #{resnet_block_forward.1} parent=0 // loop_footer_branch
    %7 = sbr.rel target = $region3
  $region8: #{resnet_block_forward.1} parent=0 // loop_exit
    _

</llo_original>
